<compile_context>
chip_gen: v6e
topology: v6e:2x2x1
jax: 0.10.0
libtpu: 0.0.40
codegen_flags: <defaults>
</compile_context>

<pallas_src>
import jax
import jax.numpy as jnp
from jax.experimental import pallas as pl
from jax.experimental.pallas import tpu as pltpu

HIDDEN = 512  # conv1 output channels, fixed by the module


def _attn_kernel(x_ref, w1_ref, shift_ref, w2_ref, b2_ref, o_ref):
    # x_ref:     (C, TP)    f32   pixel tile (channels on sublanes, pixels on lanes)
    # w1_ref:    (512, C)   bf16  conv1 weight with BN scale folded in
    # shift_ref: (512, 1)   f32   folded BN shift = beta - mean * scale
    # w2_ref:    (512, 1)   f32   conv2 weight column
    # b2_ref:    (1, 1)     f32   conv2 bias (SMEM scalar)
    # o_ref:     (1, TP)    f32   attention tile (lane dense)
    x_bf = x_ref[...].astype(jnp.bfloat16)               # feed MXU bf16 operands
    h = jnp.dot(w1_ref[...], x_bf,
                preferred_element_type=jnp.float32)      # (512, TP), f32 accum
    h = jnp.maximum(h + shift_ref[...], 0.0)             # BN shift + relu (f32 VPU)
    # 512 -> 1 projection off the MXU: VPU multiply + cross-sublane reduce.
    y = jnp.sum(h * w2_ref[...], axis=0, keepdims=True) + b2_ref[0, 0]
    o_ref[...] = jax.nn.sigmoid(y).astype(o_ref.dtype)   # (1, TP)


def spatial_attention_2d(x_nchw, w1, gamma, beta, running_mean, running_var,
                         w2, b2, *, eps=1e-5, tile_pix=512):
    """x_nchw: [B, C, H, W] float32.  Returns attention map [B, 1, H, W] float32."""
    B, C, H, W = x_nchw.shape
    hw = H * W

    # --- channels-first flatten: free reshape, no transpose ---
    x = x_nchw.reshape(B, C, hw)

    # Pixel-tile size: multiple of 128, capped by the (rounded-up) row length.
    hw_r = -(-hw // 128) * 128
    tp = min(-(-tile_pix // 128) * 128, hw_r)
    hw_pad = -(-hw // tp) * tp
    if hw_pad != hw:
        x = jnp.pad(x, ((0, 0), (0, 0), (0, hw_pad - hw)))

    # --- fold eval-mode BatchNorm2d into conv1 (no bias on conv1) ---
    scale = gamma / jnp.sqrt(running_var + eps)                       # (512,)
    w1_mat = (w1.reshape(HIDDEN, C).astype(jnp.float32)
              * scale[:, None]).astype(jnp.bfloat16)                  # (512, C) bf16
    shift = (beta - running_mean * scale).reshape(HIDDEN, 1).astype(jnp.float32)
    w2_col = w2.reshape(1, HIDDEN).T.astype(jnp.float32)              # (512, 1)
    b2_mat = b2.reshape(1, 1).astype(jnp.float32)                     # (1, 1) -> SMEM

    grid = (B, hw_pad // tp)

    out = pl.pallas_call(
        _attn_kernel,
        out_shape=jax.ShapeDtypeStruct((B, 1, hw_pad), jnp.float32),
        grid_spec=pltpu.PrefetchScalarGridSpec(
            num_scalar_prefetch=0,
            grid=grid,
            in_specs=[
                pl.BlockSpec((None, C, tp), lambda b, j: (b, 0, j)),   # x tile
                pl.BlockSpec((HIDDEN, C), lambda b, j: (0, 0)),        # W1*scale (resident)
                pl.BlockSpec((HIDDEN, 1), lambda b, j: (0, 0)),        # BN shift
                pl.BlockSpec((HIDDEN, 1), lambda b, j: (0, 0)),        # W2 column
                pl.BlockSpec(memory_space=pltpu.MemorySpace.SMEM),     # b2 scalar
            ],
            out_specs=pl.BlockSpec((None, 1, tp), lambda b, j: (b, 0, j)),
        ),
        compiler_params=pltpu.CompilerParams(
            dimension_semantics=("parallel", "parallel"),   # shard across TCs (v7x)
            vmem_limit_bytes=48 * 1024 * 1024),             # > v5e 16MiB default, < v7x 64MiB
    )(x, w1_mat, shift, w2_col, b2_mat)

    return out[:, :, :hw].reshape(B, 1, H, W)


def _reference(x_nchw, w1, gamma, beta, running_mean, running_var, w2, b2,
               eps=1e-5):
    # pure-JAX f32 reference of the same forward
    B, C, H, W = x_nchw.shape
    x = jnp.transpose(x_nchw, (0, 2, 3, 1)).reshape(-1, C)
    h = x @ w1.reshape(HIDDEN, C).T
    h = (h - running_mean) / jnp.sqrt(running_var + eps) * gamma + beta
    h = jnp.maximum(h, 0.0)
    y = h @ w2.reshape(1, HIDDEN).T + b2
    y = jax.nn.sigmoid(y)
    return jnp.transpose(y.reshape(B, H, W, 1), (0, 3, 1, 2))


if __name__ == "__main__":
    key = jax.random.PRNGKey(0)
    B, C, H, W = 2, 4, 16, 16
    k = jax.random.split(key, 8)

    x = jax.random.normal(k[0], (B, C, H, W), jnp.float32)
    # conv1: (512, C, 1, 1), no bias
    w1 = jax.random.normal(k[1], (HIDDEN, C, 1, 1), jnp.float32) * 0.1
    # BatchNorm2d(512) affine params + running stats
    gamma = 1.0 + 0.1 * jax.random.normal(k[2], (HIDDEN,), jnp.float32)
    beta = 0.1 * jax.random.normal(k[3], (HIDDEN,), jnp.float32)
    running_mean = 0.1 * jax.random.normal(k[4], (HIDDEN,), jnp.float32)
    running_var = jnp.abs(1.0 + 0.1 * jax.random.normal(k[5], (HIDDEN,),
                                                        jnp.float32))
    # conv2: (1, 512, 1, 1) with bias
    w2 = jax.random.normal(k[6], (1, HIDDEN, 1, 1), jnp.float32) * 0.05
    b2 = 0.1 * jax.random.normal(k[7], (1,), jnp.float32)

    out = spatial_attention_2d(x, w1, gamma, beta, running_mean, running_var,
                               w2, b2)
    out = jax.block_until_ready(out)
    ref = _reference(x, w1, gamma, beta, running_mean, running_var, w2, b2)

    assert out.shape == (B, 1, H, W), out.shape
    # bf16 MXU inputs -> relaxed tolerance vs the f32 reference.
    max_err = float(jnp.max(jnp.abs(out - ref)))
    assert jnp.allclose(out, ref, atol=2e-2, rtol=2e-2), max_err
    print("KERNEL_OK")
</pallas_src>

<mosaic_0001>
module attributes {stable_mosaic.version = 11 : i64} {
  func.func @_attn_kernel(%arg0: i32, %arg1: i32, %arg2: memref<1x4x256xf32, #tpu.memory_space<vmem>>, %arg3: memref<512x4xbf16, #tpu.memory_space<vmem>>, %arg4: memref<512x1xf32, #tpu.memory_space<vmem>>, %arg5: memref<512x1xf32, #tpu.memory_space<vmem>>, %arg6: memref<1x1xf32, #tpu.memory_space<smem>>, %arg7: memref<1x1x256xf32, #tpu.memory_space<vmem>>) attributes {dimension_semantics = [#tpu.dimension_semantics<parallel>, #tpu.dimension_semantics<parallel>], iteration_bounds = array<i64: 2, 1>, scalar_prefetch = 0 : i64, scratch_operands = 0 : i64, tpu.core_type = #tpu.core_type<tc>, window_params = [{transform_indices = @transform_0, window_bounds = array<i64: 1, 4, 256>}, {pipeline_mode = #tpu.pipeline_mode<synchronous>, transform_indices = @transform_1, window_bounds = array<i64: 512, 4>}, {pipeline_mode = #tpu.pipeline_mode<synchronous>, transform_indices = @transform_2, window_bounds = array<i64: 512, 1>}, {pipeline_mode = #tpu.pipeline_mode<synchronous>, transform_indices = @transform_3, window_bounds = array<i64: 512, 1>}, {transform_indices = @transform_4, window_bounds = array<i64: 1, 1>}, {transform_indices = @transform_5, window_bounds = array<i64: 1, 1, 256>}]} {
    %c0 = arith.constant 0 : index
    %c0_0 = arith.constant 0 : index
    %c0_1 = arith.constant 0 : index
    %0 = vector.load %arg2[%c0, %c0_0, %c0_1] : memref<1x4x256xf32, #tpu.memory_space<vmem>>, vector<1x4x256xf32>
    %1 = vector.shape_cast %0 : vector<1x4x256xf32> to vector<4x256xf32>
    %2 = arith.truncf %1 : vector<4x256xf32> to vector<4x256xbf16>
    %c0_2 = arith.constant 0 : index
    %c0_3 = arith.constant 0 : index
    %3 = vector.load %arg3[%c0_2, %c0_3] : memref<512x4xbf16, #tpu.memory_space<vmem>>, vector<512x4xbf16>
    %cst = arith.constant dense<0.000000e+00> : vector<512x256xf32>
    %4 = tpu.matmul %3, %2, %cst {dimension_numbers = #tpu.dot_dimension_numbers<[1], [0], [0], [1], [0, 0, 1, 1], [], []>} : vector<512x4xbf16>, vector<4x256xbf16>, vector<512x256xf32> -> vector<512x256xf32>
    %c0_4 = arith.constant 0 : index
    %c0_5 = arith.constant 0 : index
    %5 = vector.load %arg4[%c0_4, %c0_5] : memref<512x1xf32, #tpu.memory_space<vmem>>, vector<512x1xf32>
    %6 = vector.broadcast %5 : vector<512x1xf32> to vector<512x256xf32>
    %7 = arith.addf %4, %6 : vector<512x256xf32>
    %cst_6 = arith.constant 0.000000e+00 : f32
    %8 = vector.broadcast %cst_6 : f32 to vector<512x256xf32>
    %9 = arith.maximumf %7, %8 : vector<512x256xf32>
    %c0_7 = arith.constant 0 : index
    %c0_8 = arith.constant 0 : index
    %10 = vector.load %arg5[%c0_7, %c0_8] : memref<512x1xf32, #tpu.memory_space<vmem>>, vector<512x1xf32>
    %11 = vector.broadcast %10 : vector<512x1xf32> to vector<512x256xf32>
    %12 = arith.mulf %9, %11 : vector<512x256xf32>
    %cst_9 = arith.constant dense<0.000000e+00> : vector<256xf32>
    %13 = vector.multi_reduction <add>, %12, %cst_9 [0] : vector<512x256xf32> to vector<256xf32>
    %14 = vector.shape_cast %13 : vector<256xf32> to vector<1x256xf32>
    %c0_10 = arith.constant 0 : index
    %c0_11 = arith.constant 0 : index
    %15 = memref.load %arg6[%c0_10, %c0_11] : memref<1x1xf32, #tpu.memory_space<smem>>
    %16 = vector.broadcast %15 : f32 to vector<1x256xf32>
    %17 = arith.addf %14, %16 : vector<1x256xf32>
    %18 = arith.negf %17 : vector<1x256xf32>
    %19 = math.exp %18 : vector<1x256xf32>
    %cst_12 = arith.constant 1.000000e+00 : f32
    %20 = vector.broadcast %cst_12 : f32 to vector<1x256xf32>
    %21 = arith.addf %20, %19 : vector<1x256xf32>
    %22 = arith.divf %20, %21 : vector<1x256xf32>
    %c0_13 = arith.constant 0 : index
    %c0_14 = arith.constant 0 : index
    %c0_15 = arith.constant 0 : index
    %23 = vector.load %arg7[%c0_13, %c0_14, %c0_15] : memref<1x1x256xf32, #tpu.memory_space<vmem>>, vector<1x1x256xf32>
    %24 = vector.shape_cast %23 : vector<1x1x256xf32> to vector<1x256xf32>
    %25 = vector.shape_cast %22 : vector<1x256xf32> to vector<1x1x256xf32>
    tpu.vector_store %arg7[%c0_13, %c0_14, %c0_15], %25 {strides = array<i32>} : memref<1x1x256xf32, #tpu.memory_space<vmem>>, vector<1x1x256xf32>,
    return
  }
  func.func @transform_0(%arg0: i32, %arg1: i32) -> (i32, i32, i32) {
    %c0_i32 = arith.constant 0 : i32
    %c0_i32_0 = arith.constant 0 : i32
    return %arg0, %c0_i32, %arg1 : i32, i32, i32
  }
  func.func @transform_1(%arg0: i32, %arg1: i32) -> (i32, i32) {
    %c0_i32 = arith.constant 0 : i32
    %c0_i32_0 = arith.constant 0 : i32
    %c0_i32_1 = arith.constant 0 : i32
    return %c0_i32, %c0_i32_0 : i32, i32
  }
  func.func @transform_2(%arg0: i32, %arg1: i32) -> (i32, i32) {
    %c0_i32 = arith.constant 0 : i32
    %c0_i32_0 = arith.constant 0 : i32
    %c0_i32_1 = arith.constant 0 : i32
    return %c0_i32, %c0_i32_0 : i32, i32
  }
  func.func @transform_3(%arg0: i32, %arg1: i32) -> (i32, i32) {
    %c0_i32 = arith.constant 0 : i32
    %c0_i32_0 = arith.constant 0 : i32
    %c0_i32_1 = arith.constant 0 : i32
    return %c0_i32, %c0_i32_0 : i32, i32
  }
  func.func @transform_4(%arg0: i32, %arg1: i32) -> (i32, i32) {
    %c0_i32 = arith.constant 0 : i32
    %c0_i32_0 = arith.constant 0 : i32
    %c0_i32_1 = arith.constant 0 : i32
    return %c0_i32, %c0_i32_0 : i32, i32
  }
  func.func @transform_5(%arg0: i32, %arg1: i32) -> (i32, i32, i32) {
    %c0_i32 = arith.constant 0 : i32
    %c0_i32_0 = arith.constant 0 : i32
    return %arg0, %c0_i32, %arg1 : i32, i32, i32
  }
}

</mosaic_0001>

<llo_original>
// kernel: tpu_custom_call.1
$region0: #{tpu_custom_call.1}
  #allocation0 [shape = 'u32[]', space=smem, size = 0x4, offset = 0x4, fixed_abs, tag = 'smem constant byte address 0x4 - core index']
  #allocation1 [shape = 'u32[144,128]{1,0:T(1,128)}', space=vmem, size = 0x12000, scoped, tag = 'internal scratch']
  #allocation2 [shape = 'f32[1,1]{1,0:T(1,128)S(6)}', space=smem, size = 0x200, scoped, tag = 'scoped memory for tpu_custom_call.1']
  %s0 = inlined_call_operand.vmem [shape: f32[2,4,256], index: 0, kind: input, shape index: {}]
  %s1 = inlined_call_operand.vmem [shape: bf16[512,4], index: 1, kind: input, shape index: {}]
  %s2 = inlined_call_operand.vmem [shape: f32[512,1], index: 2, kind: input, shape index: {}]
  %s3 = inlined_call_operand.vmem [shape: f32[512,1], index: 3, kind: input, shape index: {}]
  %s4 = inlined_call_operand.<no memory space> [shape: f32[1,1], index: 4, kind: input, shape index: {}]
  %s5 = inlined_call_operand.hbm [shape: f32[2,1,256], index: 5, kind: output, shape index: {}]
  %s6 = sld [smem:[#allocation0]]
  $region53: #{tpu_custom_call.1} parent=0
    _
  %s8 = ssub.s32 1, %s6
  %s9 = scalar_select 0, %s8, %s6
  %10 = sst [smem:[#allocation2]] %s4
  $region1: #{tpu_custom_call.1} parent=0
    #allocation3 [shape = 'u8[2048]{0}', space=vmem, size = 0x800, scoped, tag = 'output window, operand 0']
    #allocation4 [shape = 's32[2]{0}', space=sflag, size = 0x8, scoped, tag = 'scoped memory for tpu_custom_call.1']
    %11 = vsyncpa [#allocation4], 0
    %s12 = scalar_lea.sflag [#allocation4], 1
    %13 = vsyncpa %s12, 0
    loop: start=0, step=1, limit=4
    $region2: #{tpu_custom_call.1} parent=1 // loop_pre_header
      _
    $region3: #{tpu_custom_call.1} parent=1 // loop_header
      %s15 = sphi 0, %s19
      %p16 = scmp.ge.s32.totalorder %s15, 4
      %s22 = sphi 0, %s34
      %s23 = sphi 0, %s30
      %s24 = sphi 0, %s22
      %s25 = sphi 0, %s23
      %s26 = sphi 0, %s24
      %s27 = sphi 0, %s25
      %s39 = sphi 0, %s41
      %s42 = sphi 0, %s39
      %s43 = sphi 0, %s42
      %s59 = sphi 0, %s43
      %s63 = sphi 0, %s63
      %s65 = sphi 0, %s63
      %s66 = sphi 0, %s65
      %s80 = sphi 0, %s66
      %s84 = sphi 0, %s84
      %s86 = sphi 0, %s84
      %s87 = sphi 0, %s86
      %s101 = sphi 0, %s87
      %s105 = sphi 0, %s105
      %s107 = sphi 0, %s105
      %s108 = sphi 0, %s107
      %s122 = sphi 0, %s108
      %s126 = sphi 0, %s126
      %s128 = sphi 0, %s126
      %s129 = sphi 0, %s128
      %s143 = sphi 0, %s129
      %s151 = sphi 0, %s153
      %s154 = sphi 0, %s151
      %s155 = sphi 0, %s154
      %s171 = sphi 0, %s155
    $region4: #{tpu_custom_call.1} parent=1 // loop_header_branch
      %18 = sbr.rel (%p16) target = $region8
    $region5: #{tpu_custom_call.1} parent=1 // loop_body
      %s20 = ssub.s32 %s15, 1
      %s21 = ssub.s32 %s15, 2
      %s28 = sadd.s32 1, %s23
      %p29 = scmp.ge.s32.totalorder %s28, 1
      %s30 = scalar_select %p29, 0, %s28
      %s31 = sadd.s32 1, %s22
      %s32 = scalar_select %p29, %s31, %s22
      %p33 = scmp.ge.s32.totalorder %s32, 2
      %s34 = scalar_select %p33, 0, %s32
      %s35 = ssub.s32 %s22, %s34
      %s36 = ssub.s32 %s23, %s30
      %s37 = sor.u32 %s35, %s36
      %p38 = scmp.eq.s32.totalorder %s37, 0
      %s40 = sadd.s32 %s39, 1
      %s41 = scalar_select %p38, %s39, %s40
      %p44 = pneg %p38
      %p45 = scmp.eq.s32.totalorder %s15, 1
      %p46 = por %p44, %p45
      %p47 = scmp.ne.s32.totalorder %s39, %s42
      %p48 = scmp.eq.s32.totalorder %s15, 0
      %p49 = por %p47, %p48
      %p50 = scmp.ne.s32.totalorder %s39, %s42
      %p51 = scmp.eq.s32.totalorder %s20, 1
      %p52 = por %p50, %p51
      %p53 = scmp.ne.s32.totalorder %s42, %s43
      %p54 = scmp.eq.s32.totalorder %s20, 0
      %p55 = por %p53, %p54
      %p56 = scmp.ne.s32.totalorder %s42, %s43
      %p57 = scmp.eq.s32.totalorder %s21, 1
      %p58 = por %p56, %p57
      %p60 = scmp.ne.s32.totalorder %s43, %s59
      %p61 = scmp.eq.s32.totalorder %s21, 0
      %p62 = por %p60, %p61
      %s64 = sadd.s32 %s63, 1
      %p67 = scmp.eq.s32.totalorder %s15, 1
      %p68 = scmp.ne.s32.totalorder %s63, %s65
      %p69 = scmp.eq.s32.totalorder %s15, 0
      %p70 = por %p68, %p69
      %p71 = scmp.ne.s32.totalorder %s63, %s65
      %p72 = scmp.eq.s32.totalorder %s20, 1
      %p73 = por %p71, %p72
      %p74 = scmp.ne.s32.totalorder %s65, %s66
      %p75 = scmp.eq.s32.totalorder %s20, 0
      %p76 = por %p74, %p75
      %p77 = scmp.ne.s32.totalorder %s65, %s66
      %p78 = scmp.eq.s32.totalorder %s21, 1
      %p79 = por %p77, %p78
      %p81 = scmp.ne.s32.totalorder %s66, %s80
      %p82 = scmp.eq.s32.totalorder %s21, 0
      %p83 = por %p81, %p82
      %s85 = sadd.s32 %s84, 1
      %p88 = scmp.eq.s32.totalorder %s15, 1
      %p89 = scmp.ne.s32.totalorder %s84, %s86
      %p90 = scmp.eq.s32.totalorder %s15, 0
      %p91 = por %p89, %p90
      %p92 = scmp.ne.s32.totalorder %s84, %s86
      %p93 = scmp.eq.s32.totalorder %s20, 1
      %p94 = por %p92, %p93
      %p95 = scmp.ne.s32.totalorder %s86, %s87
      %p96 = scmp.eq.s32.totalorder %s20, 0
      %p97 = por %p95, %p96
      %p98 = scmp.ne.s32.totalorder %s86, %s87
      %p99 = scmp.eq.s32.totalorder %s21, 1
      %p100 = por %p98, %p99
      %p102 = scmp.ne.s32.totalorder %s87, %s101
      %p103 = scmp.eq.s32.totalorder %s21, 0
      %p104 = por %p102, %p103
      %s106 = sadd.s32 %s105, 1
      %p109 = scmp.eq.s32.totalorder %s15, 1
      %p110 = scmp.ne.s32.totalorder %s105, %s107
      %p111 = scmp.eq.s32.totalorder %s15, 0
      %p112 = por %p110, %p111
      %p113 = scmp.ne.s32.totalorder %s105, %s107
      %p114 = scmp.eq.s32.totalorder %s20, 1
      %p115 = por %p113, %p114
      %p116 = scmp.ne.s32.totalorder %s107, %s108
      %p117 = scmp.eq.s32.totalorder %s20, 0
      %p118 = por %p116, %p117
      %p119 = scmp.ne.s32.totalorder %s107, %s108
      %p120 = scmp.eq.s32.totalorder %s21, 1
      %p121 = por %p119, %p120
      %p123 = scmp.ne.s32.totalorder %s108, %s122
      %p124 = scmp.eq.s32.totalorder %s21, 0
      %p125 = por %p123, %p124
      %s127 = sadd.s32 %s126, 1
      %p130 = scmp.eq.s32.totalorder %s15, 1
      %p131 = scmp.ne.s32.totalorder %s126, %s128
      %p132 = scmp.eq.s32.totalorder %s15, 0
      %p133 = por %p131, %p132
      %p134 = scmp.ne.s32.totalorder %s126, %s128
      %p135 = scmp.eq.s32.totalorder %s20, 1
      %p136 = por %p134, %p135
      %p137 = scmp.ne.s32.totalorder %s128, %s129
      %p138 = scmp.eq.s32.totalorder %s20, 0
      %p139 = por %p137, %p138
      %p140 = scmp.ne.s32.totalorder %s128, %s129
      %p141 = scmp.eq.s32.totalorder %s21, 1
      %p142 = por %p140, %p141
      %p144 = scmp.ne.s32.totalorder %s129, %s143
      %p145 = scmp.eq.s32.totalorder %s21, 0
      %p146 = por %p144, %p145
      %s147 = ssub.s32 %s22, %s34
      %s148 = ssub.s32 %s23, %s30
      %s149 = sor.u32 %s147, %s148
      %p150 = scmp.eq.s32.totalorder %s149, 0
      %s152 = sadd.s32 %s151, 1
      %s153 = scalar_select %p150, %s151, %s152
      %p156 = pneg %p150
      %p157 = scmp.eq.s32.totalorder %s15, 1
      %p158 = por %p156, %p157
      %p159 = scmp.ne.s32.totalorder %s151, %s154
      %p160 = scmp.eq.s32.totalorder %s15, 0
      %p161 = por %p159, %p160
      %p162 = scmp.ne.s32.totalorder %s151, %s154
      %p163 = scmp.eq.s32.totalorder %s20, 1
      %p164 = por %p162, %p163
      %p165 = scmp.ne.s32.totalorder %s154, %s155
      %p166 = scmp.eq.s32.totalorder %s20, 0
      %p167 = por %p165, %p166
      %p168 = scmp.ne.s32.totalorder %s154, %s155
      %p169 = scmp.eq.s32.totalorder %s21, 1
      %p170 = por %p168, %p169
      %p172 = scmp.ne.s32.totalorder %s155, %s171
      %p173 = scmp.eq.s32.totalorder %s21, 0
      %p174 = por %p172, %p173
      %p175 = scmp.le.s32.totalorder 1, %s15
      %p176 = scmp.lt.s32.totalorder %s15, 3
      %p177 = pnand %p175, %p176
      %p178 = pneg %p177
      // Predicated region
      $region9: #{tpu_custom_call.1} parent=5 // pred_check
        _
      $region10: #{tpu_custom_call.1} parent=5 // pred_check_branch
        %180 = sbr.rel (%p177) target = $region12
      $region11: #{tpu_custom_call.1} parent=5 // pred_region
        %s181 = ssub.s32 %s15, 1
        // Predicated region
        $region13: #{tpu_custom_call.1} parent=11 // pred_check
          %p182 = pneg %p76
        $region14: #{tpu_custom_call.1} parent=11 // pred_check_branch
          %184 = sbr.rel (%p182) target = $region16
        $region15: #{tpu_custom_call.1} parent=11 // pred_region
          _
        $region16: #{tpu_custom_call.1} parent=11 // pred_fallthru
          _
        // Predicated region
        $region17: #{tpu_custom_call.1} parent=11 // pred_check
          %p185 = pneg %p97
        $region18: #{tpu_custom_call.1} parent=11 // pred_check_branch
          %187 = sbr.rel (%p185) target = $region20
        $region19: #{tpu_custom_call.1} parent=11 // pred_region
          _
        $region20: #{tpu_custom_call.1} parent=11 // pred_fallthru
          _
        // Predicated region
        $region21: #{tpu_custom_call.1} parent=11 // pred_check
          %p188 = pneg %p118
        $region22: #{tpu_custom_call.1} parent=11 // pred_check_branch
          %190 = sbr.rel (%p188) target = $region24
        $region23: #{tpu_custom_call.1} parent=11 // pred_region
          _
        $region24: #{tpu_custom_call.1} parent=11 // pred_fallthru
          _
        // Predicated region
        $region25: #{tpu_custom_call.1} parent=11 // pred_check
          %p191 = pneg %p139
        $region26: #{tpu_custom_call.1} parent=11 // pred_check_branch
          %193 = sbr.rel (%p191) target = $region28
        $region27: #{tpu_custom_call.1} parent=11 // pred_region
          _
        $region28: #{tpu_custom_call.1} parent=11 // pred_fallthru
          _
      $region12: #{tpu_custom_call.1} parent=5 // pred_fallthru
        _
      %p194 = scmp.lt.s32.totalorder %s15, 2
      // Predicated region
      $region29: #{tpu_custom_call.1} parent=5 // pred_check
        %p195 = pneg %p194
      $region30: #{tpu_custom_call.1} parent=5 // pred_check_branch
        %197 = sbr.rel (%p195) target = $region32
      $region31: #{tpu_custom_call.1} parent=5 // pred_region
        // Predicated region
        $region33: #{tpu_custom_call.1} parent=31 // pred_check
          %p198 = pneg %p49
        $region34: #{tpu_custom_call.1} parent=31 // pred_check_branch
          %200 = sbr.rel (%p198) target = $region36
        $region35: #{tpu_custom_call.1} parent=31 // pred_region
          %s201 = smul.u32 2, %s23
          %p202 = scmp.lt.s32.totalorder %s22, 1
          %s203 = scalar_select %p202, %s22, 1
          %p204 = scmp.lt.s32.totalorder %s201, 1
          %s205 = scalar_select %p204, %s201, 1
          %s206 = smul.addr %s203, 2
          %s207 = sadd.s32 %s205, %s206
          %s208 = smul.addr %s207, 4
          %s209 = scalar_lea.vmem %s0, %s208
          %s210 = smul.u32 2, %s23
        $region36: #{tpu_custom_call.1} parent=31 // pred_fallthru
          _
      $region32: #{tpu_custom_call.1} parent=5 // pred_fallthru
        _
      %p211 = scmp.le.s32.totalorder 1, %s15
      %p212 = scmp.lt.s32.totalorder %s15, 3
      %p213 = pnand %p211, %p212
      %p214 = pneg %p213
      // Predicated region
      $region37: #{tpu_custom_call.1} parent=5 // pred_check
        _
      $region38: #{tpu_custom_call.1} parent=5 // pred_check_branch
        %216 = sbr.rel (%p213) target = $region40
      $region39: #{tpu_custom_call.1} parent=5 // pred_region
        %s217 = ssub.s32 %s15, 1
        %s218 = smul.u32 2, %s25
        %p219 = scmp.lt.s32.totalorder %s24, 1
        %s220 = scalar_select %p219, %s24, 1
        %p221 = scmp.lt.s32.totalorder %s218, 1
        %s222 = scalar_select %p221, %s218, 1
        %s223 = smul.addr %s220, 2
        %s224 = sadd.s32 %s222, %s223
        %s225 = smul.addr %s224, 4
        %s226 = scalar_lea.vmem %s0, %s225
        %p227 = pneg %p55
        %p228 = pneg %p52
        %p229 = pneg %p76
        %p230 = pneg %p73
        %p231 = pneg %p97
        %p232 = pneg %p94
        %p233 = pneg %p118
        %p234 = pneg %p115
        %p235 = pneg %p139
        %p236 = pneg %p136
        %p237 = pneg %p167
        %p238 = pneg %p164
        %s239 = sand.u32 %s154, 1
        %s240 = scalar_lea.sflag [#allocation4], %s239
        %s241 = sand.u32 %s154, 1
        %s242 = smul.addr %s241, 2
        %s243 = scalar_lea.vmem [#allocation3], %s242
        %s244 = smul.u32 2, %s25
        %p245 = scmp.lt.s32.totalorder %s24, 1
        %s246 = scalar_select %p245, %s24, 1
        %p247 = scmp.lt.s32.totalorder %s244, 1
        %s248 = scalar_select %p247, %s244, 1
        %s249 = smul.addr %s246, 2
        %s250 = sadd.s32 %s248, %s249
        %s251 = smul.addr %s250, 4
        %s252 = scalar_lea.vmem %s0, %s251
        %s253 = smul.u32 2, %s25
        %s254 = smul.u32 2, %s25
        %v256 = vld [vmem:[%s252] sm:$0xff]
        %v258 = vcombine.high %v256, %v256
        %v260 = vpack.c.bf16 %v256, %v256
        %v261 = vpack.c.bf16 %v258, %v258
        %v262 = vld [vmem:[%s1] sm:$0xf]
        %v263 = vld [vmem:[%s1 + $0x4] sm:$0xf]
        %v264 = vld [vmem:[%s1 + $0x8] sm:$0xf]
        %v265 = vld [vmem:[%s1 + $0xc] sm:$0xf]
        %v266 = vld [vmem:[%s1 + $0x10] sm:$0xf]
        %v267 = vld [vmem:[%s1 + $0x14] sm:$0xf]
        %v268 = vld [vmem:[%s1 + $0x18] sm:$0xf]
        %v269 = vld [vmem:[%s1 + $0x1c] sm:$0xf]
        %v270 = vld [vmem:[%s1 + $0x20] sm:$0xf]
        %v271 = vld [vmem:[%s1 + $0x24] sm:$0xf]
        %v272 = vld [vmem:[%s1 + $0x28] sm:$0xf]
        %v273 = vld [vmem:[%s1 + $0x2c] sm:$0xf]
        %v274 = vld [vmem:[%s1 + $0x30] sm:$0xf]
        %v275 = vld [vmem:[%s1 + $0x34] sm:$0xf]
        %v276 = vld [vmem:[%s1 + $0x38] sm:$0xf]
        %v277 = vld [vmem:[%s1 + $0x3c] sm:$0xf]
        %v278 = vld [vmem:[%s1 + $0x40] sm:$0xf]
        %v279 = vld [vmem:[%s1 + $0x44] sm:$0xf]
        %v280 = vld [vmem:[%s1 + $0x48] sm:$0xf]
        %v281 = vld [vmem:[%s1 + $0x4c] sm:$0xf]
        %v282 = vld [vmem:[%s1 + $0x50] sm:$0xf]
        %v283 = vld [vmem:[%s1 + $0x54] sm:$0xf]
        %v284 = vld [vmem:[%s1 + $0x58] sm:$0xf]
        %v285 = vld [vmem:[%s1 + $0x5c] sm:$0xf]
        %v286 = vld [vmem:[%s1 + $0x60] sm:$0xf]
        %v287 = vld [vmem:[%s1 + $0x64] sm:$0xf]
        %v288 = vld [vmem:[%s1 + $0x68] sm:$0xf]
        %v289 = vld [vmem:[%s1 + $0x6c] sm:$0xf]
        %v290 = vld [vmem:[%s1 + $0x70] sm:$0xf]
        %v291 = vld [vmem:[%s1 + $0x74] sm:$0xf]
        %v292 = vld [vmem:[%s1 + $0x78] sm:$0xf]
        %v293 = vld [vmem:[%s1 + $0x7c] sm:$0xf]
        %v294 = vld [vmem:[%s1 + $0x80] sm:$0xf]
        %v295 = vld [vmem:[%s1 + $0x84] sm:$0xf]
        %v296 = vld [vmem:[%s1 + $0x88] sm:$0xf]
        %v297 = vld [vmem:[%s1 + $0x8c] sm:$0xf]
        %v298 = vld [vmem:[%s1 + $0x90] sm:$0xf]
        %v299 = vld [vmem:[%s1 + $0x94] sm:$0xf]
        %v300 = vld [vmem:[%s1 + $0x98] sm:$0xf]
        %v301 = vld [vmem:[%s1 + $0x9c] sm:$0xf]
        %v302 = vld [vmem:[%s1 + $0xa0] sm:$0xf]
        %v303 = vld [vmem:[%s1 + $0xa4] sm:$0xf]
        %v304 = vld [vmem:[%s1 + $0xa8] sm:$0xf]
        %v305 = vld [vmem:[%s1 + $0xac] sm:$0xf]
        %v306 = vld [vmem:[%s1 + $0xb0] sm:$0xf]
        %v307 = vld [vmem:[%s1 + $0xb4] sm:$0xf]
        %v308 = vld [vmem:[%s1 + $0xb8] sm:$0xf]
        %v309 = vld [vmem:[%s1 + $0xbc] sm:$0xf]
        %v310 = vld [vmem:[%s1 + $0xc0] sm:$0xf]
        %v311 = vld [vmem:[%s1 + $0xc4] sm:$0xf]
        %v312 = vld [vmem:[%s1 + $0xc8] sm:$0xf]
        %v313 = vld [vmem:[%s1 + $0xcc] sm:$0xf]
        %v314 = vld [vmem:[%s1 + $0xd0] sm:$0xf]
        %v315 = vld [vmem:[%s1 + $0xd4] sm:$0xf]
        %v316 = vld [vmem:[%s1 + $0xd8] sm:$0xf]
        %v317 = vld [vmem:[%s1 + $0xdc] sm:$0xf]
        %v318 = vld [vmem:[%s1 + $0xe0] sm:$0xf]
        %v319 = vld [vmem:[%s1 + $0xe4] sm:$0xf]
        %v320 = vld [vmem:[%s1 + $0xe8] sm:$0xf]
        %v321 = vld [vmem:[%s1 + $0xec] sm:$0xf]
        %v322 = vld [vmem:[%s1 + $0xf0] sm:$0xf]
        %v323 = vld [vmem:[%s1 + $0xf4] sm:$0xf]
        %v324 = vld [vmem:[%s1 + $0xf8] sm:$0xf]
        %v325 = vld [vmem:[%s1 + $0xfc] sm:$0xf]
        %v326 = vld [vmem:[%s2] sm:$0xff]
        %v327 = vld [vmem:[%s2 + $0x8] sm:$0xff]
        %v328 = vld [vmem:[%s2 + $0x10] sm:$0xff]
        %v329 = vld [vmem:[%s2 + $0x18] sm:$0xff]
        %v330 = vld [vmem:[%s2 + $0x20] sm:$0xff]
        %v331 = vld [vmem:[%s2 + $0x28] sm:$0xff]
        %v332 = vld [vmem:[%s2 + $0x30] sm:$0xff]
        %v333 = vld [vmem:[%s2 + $0x38] sm:$0xff]
        %v334 = vld [vmem:[%s2 + $0x40] sm:$0xff]
        %v335 = vld [vmem:[%s2 + $0x48] sm:$0xff]
        %v336 = vld [vmem:[%s2 + $0x50] sm:$0xff]
        %v337 = vld [vmem:[%s2 + $0x58] sm:$0xff]
        %v338 = vld [vmem:[%s2 + $0x60] sm:$0xff]
        %v339 = vld [vmem:[%s2 + $0x68] sm:$0xff]
        %v340 = vld [vmem:[%s2 + $0x70] sm:$0xff]
        %v341 = vld [vmem:[%s2 + $0x78] sm:$0xff]
        %v342 = vld [vmem:[%s2 + $0x80] sm:$0xff]
        %v343 = vld [vmem:[%s2 + $0x88] sm:$0xff]
        %v344 = vld [vmem:[%s2 + $0x90] sm:$0xff]
        %v345 = vld [vmem:[%s2 + $0x98] sm:$0xff]
        %v346 = vld [vmem:[%s2 + $0xa0] sm:$0xff]
        %v347 = vld [vmem:[%s2 + $0xa8] sm:$0xff]
        %v348 = vld [vmem:[%s2 + $0xb0] sm:$0xff]
        %v349 = vld [vmem:[%s2 + $0xb8] sm:$0xff]
        %v350 = vld [vmem:[%s2 + $0xc0] sm:$0xff]
        %v351 = vld [vmem:[%s2 + $0xc8] sm:$0xff]
        %v352 = vld [vmem:[%s2 + $0xd0] sm:$0xff]
        %v353 = vld [vmem:[%s2 + $0xd8] sm:$0xff]
        %v354 = vld [vmem:[%s2 + $0xe0] sm:$0xff]
        %v355 = vld [vmem:[%s2 + $0xe8] sm:$0xff]
        %v356 = vld [vmem:[%s2 + $0xf0] sm:$0xff]
        %v357 = vld [vmem:[%s2 + $0xf8] sm:$0xff]
        %v358 = vld [vmem:[%s2 + $0x100] sm:$0xff]
        %v359 = vld [vmem:[%s2 + $0x108] sm:$0xff]
        %v360 = vld [vmem:[%s2 + $0x110] sm:$0xff]
        %v361 = vld [vmem:[%s2 + $0x118] sm:$0xff]
        %v362 = vld [vmem:[%s2 + $0x120] sm:$0xff]
        %v363 = vld [vmem:[%s2 + $0x128] sm:$0xff]
        %v364 = vld [vmem:[%s2 + $0x130] sm:$0xff]
        %v365 = vld [vmem:[%s2 + $0x138] sm:$0xff]
        %v366 = vld [vmem:[%s2 + $0x140] sm:$0xff]
        %v367 = vld [vmem:[%s2 + $0x148] sm:$0xff]
        %v368 = vld [vmem:[%s2 + $0x150] sm:$0xff]
        %v369 = vld [vmem:[%s2 + $0x158] sm:$0xff]
        %v370 = vld [vmem:[%s2 + $0x160] sm:$0xff]
        %v371 = vld [vmem:[%s2 + $0x168] sm:$0xff]
        %v372 = vld [vmem:[%s2 + $0x170] sm:$0xff]
        %v373 = vld [vmem:[%s2 + $0x178] sm:$0xff]
        %v374 = vld [vmem:[%s2 + $0x180] sm:$0xff]
        %v375 = vld [vmem:[%s2 + $0x188] sm:$0xff]
        %v376 = vld [vmem:[%s2 + $0x190] sm:$0xff]
        %v377 = vld [vmem:[%s2 + $0x198] sm:$0xff]
        %v378 = vld [vmem:[%s2 + $0x1a0] sm:$0xff]
        %v379 = vld [vmem:[%s2 + $0x1a8] sm:$0xff]
        %v380 = vld [vmem:[%s2 + $0x1b0] sm:$0xff]
        %v381 = vld [vmem:[%s2 + $0x1b8] sm:$0xff]
        %v382 = vld [vmem:[%s2 + $0x1c0] sm:$0xff]
        %v383 = vld [vmem:[%s2 + $0x1c8] sm:$0xff]
        %v384 = vld [vmem:[%s2 + $0x1d0] sm:$0xff]
        %v385 = vld [vmem:[%s2 + $0x1d8] sm:$0xff]
        %v386 = vld [vmem:[%s2 + $0x1e0] sm:$0xff]
        %v387 = vld [vmem:[%s2 + $0x1e8] sm:$0xff]
        %v388 = vld [vmem:[%s2 + $0x1f0] sm:$0xff]
        %v389 = vld [vmem:[%s2 + $0x1f8] sm:$0xff]
        %391 = vset.pattern.permute.xlu0 0
        %392 = vperm.xlu0 %391, %v326
        %v393 = vpop.permute.xlu0 %392
        %396 = vset.pattern.permute.xlu0 0
        %397 = vperm.xlu0 %396, %v327
        %v398 = vpop.permute.xlu0 %397
        %401 = vset.pattern.permute.xlu0 0
        %402 = vperm.xlu0 %401, %v328
        %v403 = vpop.permute.xlu0 %402
        %406 = vset.pattern.permute.xlu0 0
        %407 = vperm.xlu0 %406, %v329
        %v408 = vpop.permute.xlu0 %407
        %411 = vset.pattern.permute.xlu0 0
        %412 = vperm.xlu0 %411, %v330
        %v413 = vpop.permute.xlu0 %412
        %416 = vset.pattern.permute.xlu0 0
        %417 = vperm.xlu0 %416, %v331
        %v418 = vpop.permute.xlu0 %417
        %421 = vset.pattern.permute.xlu0 0
        %422 = vperm.xlu0 %421, %v332
        %v423 = vpop.permute.xlu0 %422
        %426 = vset.pattern.permute.xlu0 0
        %427 = vperm.xlu0 %426, %v333
        %v428 = vpop.permute.xlu0 %427
        %431 = vset.pattern.permute.xlu0 0
        %432 = vperm.xlu0 %431, %v334
        %v433 = vpop.permute.xlu0 %432
        %436 = vset.pattern.permute.xlu0 0
        %437 = vperm.xlu0 %436, %v335
        %v438 = vpop.permute.xlu0 %437
        %441 = vset.pattern.permute.xlu0 0
        %442 = vperm.xlu0 %441, %v336
        %v443 = vpop.permute.xlu0 %442
        %446 = vset.pattern.permute.xlu0 0
        %447 = vperm.xlu0 %446, %v337
        %v448 = vpop.permute.xlu0 %447
        %451 = vset.pattern.permute.xlu0 0
        %452 = vperm.xlu0 %451, %v338
        %v453 = vpop.permute.xlu0 %452
        %456 = vset.pattern.permute.xlu0 0
        %457 = vperm.xlu0 %456, %v339
        %v458 = vpop.permute.xlu0 %457
        %461 = vset.pattern.permute.xlu0 0
        %462 = vperm.xlu0 %461, %v340
        %v463 = vpop.permute.xlu0 %462
        %466 = vset.pattern.permute.xlu0 0
        %467 = vperm.xlu0 %466, %v341
        %v468 = vpop.permute.xlu0 %467
        %471 = vset.pattern.permute.xlu0 0
        %472 = vperm.xlu0 %471, %v342
        %v473 = vpop.permute.xlu0 %472
        %476 = vset.pattern.permute.xlu0 0
        %477 = vperm.xlu0 %476, %v343
        %v478 = vpop.permute.xlu0 %477
        %481 = vset.pattern.permute.xlu0 0
        %482 = vperm.xlu0 %481, %v344
        %v483 = vpop.permute.xlu0 %482
        %486 = vset.pattern.permute.xlu0 0
        %487 = vperm.xlu0 %486, %v345
        %v488 = vpop.permute.xlu0 %487
        %491 = vset.pattern.permute.xlu0 0
        %492 = vperm.xlu0 %491, %v346
        %v493 = vpop.permute.xlu0 %492
        %496 = vset.pattern.permute.xlu0 0
        %497 = vperm.xlu0 %496, %v347
        %v498 = vpop.permute.xlu0 %497
        %501 = vset.pattern.permute.xlu0 0
        %502 = vperm.xlu0 %501, %v348
        %v503 = vpop.permute.xlu0 %502
        %506 = vset.pattern.permute.xlu0 0
        %507 = vperm.xlu0 %506, %v349
        %v508 = vpop.permute.xlu0 %507
        %511 = vset.pattern.permute.xlu0 0
        %512 = vperm.xlu0 %511, %v350
        %v513 = vpop.permute.xlu0 %512
        %516 = vset.pattern.permute.xlu0 0
        %517 = vperm.xlu0 %516, %v351
        %v518 = vpop.permute.xlu0 %517
        %521 = vset.pattern.permute.xlu0 0
        %522 = vperm.xlu0 %521, %v352
        %v523 = vpop.permute.xlu0 %522
        %526 = vset.pattern.permute.xlu0 0
        %527 = vperm.xlu0 %526, %v353
        %v528 = vpop.permute.xlu0 %527
        %531 = vset.pattern.permute.xlu0 0
        %532 = vperm.xlu0 %531, %v354
        %v533 = vpop.permute.xlu0 %532
        %536 = vset.pattern.permute.xlu0 0
        %537 = vperm.xlu0 %536, %v355
        %v538 = vpop.permute.xlu0 %537
        %541 = vset.pattern.permute.xlu0 0
        %542 = vperm.xlu0 %541, %v356
        %v543 = vpop.permute.xlu0 %542
        %546 = vset.pattern.permute.xlu0 0
        %547 = vperm.xlu0 %546, %v357
        %v548 = vpop.permute.xlu0 %547
        %551 = vset.pattern.permute.xlu0 0
        %552 = vperm.xlu0 %551, %v358
        %v553 = vpop.permute.xlu0 %552
        %556 = vset.pattern.permute.xlu0 0
        %557 = vperm.xlu0 %556, %v359
        %v558 = vpop.permute.xlu0 %557
        %561 = vset.pattern.permute.xlu0 0
        %562 = vperm.xlu0 %561, %v360
        %v563 = vpop.permute.xlu0 %562
        %566 = vset.pattern.permute.xlu0 0
        %567 = vperm.xlu0 %566, %v361
        %v568 = vpop.permute.xlu0 %567
        %571 = vset.pattern.permute.xlu0 0
        %572 = vperm.xlu0 %571, %v362
        %v573 = vpop.permute.xlu0 %572
        %576 = vset.pattern.permute.xlu0 0
        %577 = vperm.xlu0 %576, %v363
        %v578 = vpop.permute.xlu0 %577
        %581 = vset.pattern.permute.xlu0 0
        %582 = vperm.xlu0 %581, %v364
        %v583 = vpop.permute.xlu0 %582
        %586 = vset.pattern.permute.xlu0 0
        %587 = vperm.xlu0 %586, %v365
        %v588 = vpop.permute.xlu0 %587
        %591 = vset.pattern.permute.xlu0 0
        %592 = vperm.xlu0 %591, %v366
        %v593 = vpop.permute.xlu0 %592
        %596 = vset.pattern.permute.xlu0 0
        %597 = vperm.xlu0 %596, %v367
        %v598 = vpop.permute.xlu0 %597
        %601 = vset.pattern.permute.xlu0 0
        %602 = vperm.xlu0 %601, %v368
        %v603 = vpop.permute.xlu0 %602
        %606 = vset.pattern.permute.xlu0 0
        %607 = vperm.xlu0 %606, %v369
        %v608 = vpop.permute.xlu0 %607
        %611 = vset.pattern.permute.xlu0 0
        %612 = vperm.xlu0 %611, %v370
        %v613 = vpop.permute.xlu0 %612
        %616 = vset.pattern.permute.xlu0 0
        %617 = vperm.xlu0 %616, %v371
        %v618 = vpop.permute.xlu0 %617
        %621 = vset.pattern.permute.xlu0 0
        %622 = vperm.xlu0 %621, %v372
        %v623 = vpop.permute.xlu0 %622
        %626 = vset.pattern.permute.xlu0 0
        %627 = vperm.xlu0 %626, %v373
        %v628 = vpop.permute.xlu0 %627
        %631 = vset.pattern.permute.xlu0 0
        %632 = vperm.xlu0 %631, %v374
        %v633 = vpop.permute.xlu0 %632
        %636 = vset.pattern.permute.xlu0 0
        %637 = vperm.xlu0 %636, %v375
        %v638 = vpop.permute.xlu0 %637
        %641 = vset.pattern.permute.xlu0 0
        %642 = vperm.xlu0 %641, %v376
        %v643 = vpop.permute.xlu0 %642
        %646 = vset.pattern.permute.xlu0 0
        %647 = vperm.xlu0 %646, %v377
        %v648 = vpop.permute.xlu0 %647
        %651 = vset.pattern.permute.xlu0 0
        %652 = vperm.xlu0 %651, %v378
        %v653 = vpop.permute.xlu0 %652
        %656 = vset.pattern.permute.xlu0 0
        %657 = vperm.xlu0 %656, %v379
        %v658 = vpop.permute.xlu0 %657
        %661 = vset.pattern.permute.xlu0 0
        %662 = vperm.xlu0 %661, %v380
        %v663 = vpop.permute.xlu0 %662
        %666 = vset.pattern.permute.xlu0 0
        %667 = vperm.xlu0 %666, %v381
        %v668 = vpop.permute.xlu0 %667
        %671 = vset.pattern.permute.xlu0 0
        %672 = vperm.xlu0 %671, %v382
        %v673 = vpop.permute.xlu0 %672
        %676 = vset.pattern.permute.xlu0 0
        %677 = vperm.xlu0 %676, %v383
        %v678 = vpop.permute.xlu0 %677
        %681 = vset.pattern.permute.xlu0 0
        %682 = vperm.xlu0 %681, %v384
        %v683 = vpop.permute.xlu0 %682
        %686 = vset.pattern.permute.xlu0 0
        %687 = vperm.xlu0 %686, %v385
        %v688 = vpop.permute.xlu0 %687
        %691 = vset.pattern.permute.xlu0 0
        %692 = vperm.xlu0 %691, %v386
        %v693 = vpop.permute.xlu0 %692
        %696 = vset.pattern.permute.xlu0 0
        %697 = vperm.xlu0 %696, %v387
        %v698 = vpop.permute.xlu0 %697
        %701 = vset.pattern.permute.xlu0 0
        %702 = vperm.xlu0 %701, %v388
        %v703 = vpop.permute.xlu0 %702
        %706 = vset.pattern.permute.xlu0 0
        %707 = vperm.xlu0 %706, %v389
        %v708 = vpop.permute.xlu0 %707
        %v774 = vunpack.c.l.b16 %v262
        %v775 = vunpack.c.l.b16 %v263
        %v776 = vunpack.c.l.b16 %v264
        %v777 = vunpack.c.l.b16 %v265
        %v778 = vunpack.c.l.b16 %v266
        %v779 = vunpack.c.l.b16 %v267
        %v780 = vunpack.c.l.b16 %v268
        %v781 = vunpack.c.l.b16 %v269
        %v782 = vunpack.c.l.b16 %v270
        %v783 = vunpack.c.l.b16 %v271
        %v784 = vunpack.c.l.b16 %v272
        %v785 = vunpack.c.l.b16 %v273
        %v786 = vunpack.c.l.b16 %v274
        %v787 = vunpack.c.l.b16 %v275
        %v788 = vunpack.c.l.b16 %v276
        %v789 = vunpack.c.l.b16 %v277
        %v790 = vunpack.c.l.b16 %v278
        %v791 = vunpack.c.l.b16 %v279
        %v792 = vunpack.c.l.b16 %v280
        %v793 = vunpack.c.l.b16 %v281
        %v794 = vunpack.c.l.b16 %v282
        %v795 = vunpack.c.l.b16 %v283
        %v796 = vunpack.c.l.b16 %v284
        %v797 = vunpack.c.l.b16 %v285
        %v798 = vunpack.c.l.b16 %v286
        %v799 = vunpack.c.l.b16 %v287
        %v800 = vunpack.c.l.b16 %v288
        %v801 = vunpack.c.l.b16 %v289
        %v802 = vunpack.c.l.b16 %v290
        %v803 = vunpack.c.l.b16 %v291
        %v804 = vunpack.c.l.b16 %v292
        %v805 = vunpack.c.l.b16 %v293
        %v806 = vunpack.c.l.b16 %v294
        %v807 = vunpack.c.l.b16 %v295
        %v808 = vunpack.c.l.b16 %v296
        %v809 = vunpack.c.l.b16 %v297
        %v810 = vunpack.c.l.b16 %v298
        %v811 = vunpack.c.l.b16 %v299
        %v812 = vunpack.c.l.b16 %v300
        %v813 = vunpack.c.l.b16 %v301
        %v814 = vunpack.c.l.b16 %v302
        %v815 = vunpack.c.l.b16 %v303
        %v816 = vunpack.c.l.b16 %v304
        %v817 = vunpack.c.l.b16 %v305
        %v818 = vunpack.c.l.b16 %v306
        %v819 = vunpack.c.l.b16 %v307
        %v820 = vunpack.c.l.b16 %v308
        %v821 = vunpack.c.l.b16 %v309
        %v822 = vunpack.c.l.b16 %v310
        %v823 = vunpack.c.l.b16 %v311
        %v824 = vunpack.c.l.b16 %v312
        %v825 = vunpack.c.l.b16 %v313
        %v826 = vunpack.c.l.b16 %v314
        %v827 = vunpack.c.l.b16 %v315
        %v828 = vunpack.c.l.b16 %v316
        %v829 = vunpack.c.l.b16 %v317
        %v830 = vunpack.c.l.b16 %v318
        %v831 = vunpack.c.l.b16 %v319
        %v832 = vunpack.c.l.b16 %v320
        %v833 = vunpack.c.l.b16 %v321
        %v834 = vunpack.c.l.b16 %v322
        %v835 = vunpack.c.l.b16 %v323
        %v836 = vunpack.c.l.b16 %v324
        %v837 = vunpack.c.l.b16 %v325
        %v838 = vpack.c.b16 %v775, %v774
        %v839 = vpack.c.b16 %v777, %v776
        %v840 = vpack.c.b16 %v779, %v778
        %v841 = vpack.c.b16 %v781, %v780
        %v842 = vpack.c.b16 %v783, %v782
        %v843 = vpack.c.b16 %v785, %v784
        %v844 = vpack.c.b16 %v787, %v786
        %v845 = vpack.c.b16 %v789, %v788
        %v846 = vpack.c.b16 %v791, %v790
        %v847 = vpack.c.b16 %v793, %v792
        %v848 = vpack.c.b16 %v795, %v794
        %v849 = vpack.c.b16 %v797, %v796
        %v850 = vpack.c.b16 %v799, %v798
        %v851 = vpack.c.b16 %v801, %v800
        %v852 = vpack.c.b16 %v803, %v802
        %v853 = vpack.c.b16 %v805, %v804
        %v854 = vpack.c.b16 %v807, %v806
        %v855 = vpack.c.b16 %v809, %v808
        %v856 = vpack.c.b16 %v811, %v810
        %v857 = vpack.c.b16 %v813, %v812
        %v858 = vpack.c.b16 %v815, %v814
        %v859 = vpack.c.b16 %v817, %v816
        %v860 = vpack.c.b16 %v819, %v818
        %v861 = vpack.c.b16 %v821, %v820
        %v862 = vpack.c.b16 %v823, %v822
        %v863 = vpack.c.b16 %v825, %v824
        %v864 = vpack.c.b16 %v827, %v826
        %v865 = vpack.c.b16 %v829, %v828
        %v866 = vpack.c.b16 %v831, %v830
        %v867 = vpack.c.b16 %v833, %v832
        %v868 = vpack.c.b16 %v835, %v834
        %v869 = vpack.c.b16 %v837, %v836
        %vm870 = vcmask 31744
        %v872 = vsel %vm870, %v838, 0
        %v875 = vsel %vm870, %v839, 0
        %v878 = vsel %vm870, %v840, 0
        %v881 = vsel %vm870, %v841, 0
        %v884 = vsel %vm870, %v842, 0
        %v887 = vsel %vm870, %v843, 0
        %v890 = vsel %vm870, %v844, 0
        %v893 = vsel %vm870, %v845, 0
        %v896 = vsel %vm870, %v846, 0
        %v899 = vsel %vm870, %v847, 0
        %v902 = vsel %vm870, %v848, 0
        %v905 = vsel %vm870, %v849, 0
        %v908 = vsel %vm870, %v850, 0
        %v911 = vsel %vm870, %v851, 0
        %v914 = vsel %vm870, %v852, 0
        %v917 = vsel %vm870, %v853, 0
        %v920 = vsel %vm870, %v854, 0
        %v923 = vsel %vm870, %v855, 0
        %v926 = vsel %vm870, %v856, 0
        %v929 = vsel %vm870, %v857, 0
        %v932 = vsel %vm870, %v858, 0
        %v935 = vsel %vm870, %v859, 0
        %v938 = vsel %vm870, %v860, 0
        %v941 = vsel %vm870, %v861, 0
        %v944 = vsel %vm870, %v862, 0
        %v947 = vsel %vm870, %v863, 0
        %v950 = vsel %vm870, %v864, 0
        %v953 = vsel %vm870, %v865, 0
        %v956 = vsel %vm870, %v866, 0
        %v959 = vsel %vm870, %v867, 0
        %v962 = vsel %vm870, %v868, 0
        %v965 = vsel %vm870, %v869, 0
        %vm967 = vcmask 1041408
        %v969 = vsel %vm967, %v260, 0
        %v972 = vsel %vm967, %v261, 0
        %974 = vmatprep.subr.bf16.mxu0 0
        %975 = vmatpush1.bf16.msra.mxu0 0
        %976 = vmatprep.subr.bf16.mxu0 0
        %977 = vmatpush1.bf16.msra.mxu0 0
        %978 = vmatprep.subr.bf16.mxu0 0
        %979 = vmatpush1.bf16.msra.mxu0 0
        %980 = vmatprep.subr.bf16.mxu0 0
        %981 = vmatpush1.bf16.msra.mxu0 0
        %982 = vmatprep.subr.bf16.mxu0 0
        %983 = vmatpush1.bf16.msra.mxu0 0
        %984 = vmatprep.subr.bf16.mxu0 0
        %985 = vmatpush1.bf16.msra.mxu0 0
        %986 = vmatprep.subr.bf16.mxu0 0
        %987 = vmatpush1.bf16.msra.mxu0 0
        %988 = vmatprep.subr.bf16.mxu0 %v972
        %989 = vmatpush1.bf16.msra.mxu0 %v969
        %990 = vmatprep.subr.bf16.mxu0 0
        %991 = vmatpush2.bf16.msra.mxu0 0
        %992 = vmatprep.subr.bf16.mxu0 0
        %993 = vmatpush2.bf16.msra.mxu0 0
        %994 = vmatprep.subr.bf16.mxu0 0
        %995 = vmatpush2.bf16.msra.mxu0 0
        %996 = vmatprep.subr.bf16.mxu0 0
        %997 = vmatpush2.bf16.msra.mxu0 0
        %998 = vmatprep.subr.bf16.mxu0 0
        %999 = vmatpush2.bf16.msra.mxu0 0
        %1000 = vmatprep.subr.bf16.mxu0 0
        %1001 = vmatpush2.bf16.msra.mxu0 0
        %1002 = vmatprep.subr.bf16.mxu0 0
        %1003 = vmatpush2.bf16.msra.mxu0 0
        %1004 = vmatprep.subr.bf16.mxu0 0
        %1005 = vmatpush2.bf16.msra.mxu0 0
        %1006 = vmatprep.mubr.bf16.mxu0 0
        %1007 = vmatmul.mubr.bf16.gmra.mxu0 %v872
        %v1008 = vpop.f32.mrf.mxu0
        %v1009 = vadd.f32 %v393, %v1008
        %v1010 = vpop.f32.mrf.mxu0
        %v1011 = vadd.f32 %v393, %v1010
        %v1012 = vpop.f32.mrf.mxu0
        %v1013 = vadd.f32 %v398, %v1012
        %v1014 = vpop.f32.mrf.mxu0
        %v1015 = vadd.f32 %v398, %v1014
        %1016 = vmatprep.mubr.bf16.mxu0 0
        %1017 = vmatmul.mubr.bf16.gmra.mxu0 %v875
        %v1018 = vpop.f32.mrf.mxu0
        %v1019 = vadd.f32 %v403, %v1018
        %v1020 = vpop.f32.mrf.mxu0
        %v1021 = vadd.f32 %v403, %v1020
        %v1022 = vpop.f32.mrf.mxu0
        %v1023 = vadd.f32 %v408, %v1022
        %v1024 = vpop.f32.mrf.mxu0
        %v1025 = vadd.f32 %v408, %v1024
        %1026 = vmatprep.mubr.bf16.mxu0 0
        %1027 = vmatmul.mubr.bf16.gmra.mxu0 %v878
        %v1028 = vpop.f32.mrf.mxu0
        %v1029 = vadd.f32 %v413, %v1028
        %v1030 = vpop.f32.mrf.mxu0
        %v1031 = vadd.f32 %v413, %v1030
        %v1032 = vpop.f32.mrf.mxu0
        %v1033 = vadd.f32 %v418, %v1032
        %v1034 = vpop.f32.mrf.mxu0
        %v1035 = vadd.f32 %v418, %v1034
        %1036 = vmatprep.mubr.bf16.mxu0 0
        %1037 = vmatmul.mubr.bf16.gmra.mxu0 %v881
        %v1038 = vpop.f32.mrf.mxu0
        %v1039 = vadd.f32 %v423, %v1038
        %v1040 = vpop.f32.mrf.mxu0
        %v1041 = vadd.f32 %v423, %v1040
        %v1042 = vpop.f32.mrf.mxu0
        %v1043 = vadd.f32 %v428, %v1042
        %v1044 = vpop.f32.mrf.mxu0
        %v1045 = vadd.f32 %v428, %v1044
        %1046 = vmatprep.mubr.bf16.mxu0 0
        %1047 = vmatmul.mubr.bf16.gmra.mxu0 %v884
        %v1048 = vpop.f32.mrf.mxu0
        %v1049 = vadd.f32 %v433, %v1048
        %v1050 = vpop.f32.mrf.mxu0
        %v1051 = vadd.f32 %v433, %v1050
        %v1052 = vpop.f32.mrf.mxu0
        %v1053 = vadd.f32 %v438, %v1052
        %v1054 = vpop.f32.mrf.mxu0
        %v1055 = vadd.f32 %v438, %v1054
        %1056 = vmatprep.mubr.bf16.mxu0 0
        %1057 = vmatmul.mubr.bf16.gmra.mxu0 %v887
        %v1058 = vpop.f32.mrf.mxu0
        %v1059 = vadd.f32 %v443, %v1058
        %v1060 = vpop.f32.mrf.mxu0
        %v1061 = vadd.f32 %v443, %v1060
        %v1062 = vpop.f32.mrf.mxu0
        %v1063 = vadd.f32 %v448, %v1062
        %v1064 = vpop.f32.mrf.mxu0
        %v1065 = vadd.f32 %v448, %v1064
        %1066 = vmatprep.mubr.bf16.mxu0 0
        %1067 = vmatmul.mubr.bf16.gmra.mxu0 %v890
        %v1068 = vpop.f32.mrf.mxu0
        %v1069 = vadd.f32 %v453, %v1068
        %v1070 = vpop.f32.mrf.mxu0
        %v1071 = vadd.f32 %v453, %v1070
        %v1072 = vpop.f32.mrf.mxu0
        %v1073 = vadd.f32 %v458, %v1072
        %v1074 = vpop.f32.mrf.mxu0
        %v1075 = vadd.f32 %v458, %v1074
        %1076 = vmatprep.mubr.bf16.mxu0 0
        %1077 = vmatmul.mubr.bf16.gmra.mxu0 %v893
        %v1078 = vpop.f32.mrf.mxu0
        %v1079 = vadd.f32 %v463, %v1078
        %v1080 = vpop.f32.mrf.mxu0
        %v1081 = vadd.f32 %v463, %v1080
        %v1082 = vpop.f32.mrf.mxu0
        %v1083 = vadd.f32 %v468, %v1082
        %v1084 = vpop.f32.mrf.mxu0
        %v1085 = vadd.f32 %v468, %v1084
        %1086 = vmatprep.mubr.bf16.mxu0 0
        %1087 = vmatmul.mubr.bf16.gmra.mxu0 %v896
        %v1088 = vpop.f32.mrf.mxu0
        %v1089 = vadd.f32 %v473, %v1088
        %v1090 = vpop.f32.mrf.mxu0
        %v1091 = vadd.f32 %v473, %v1090
        %v1092 = vpop.f32.mrf.mxu0
        %v1093 = vadd.f32 %v478, %v1092
        %v1094 = vpop.f32.mrf.mxu0
        %v1095 = vadd.f32 %v478, %v1094
        %1096 = vmatprep.mubr.bf16.mxu0 0
        %1097 = vmatmul.mubr.bf16.gmra.mxu0 %v899
        %v1098 = vpop.f32.mrf.mxu0
        %v1099 = vadd.f32 %v483, %v1098
        %v1100 = vpop.f32.mrf.mxu0
        %v1101 = vadd.f32 %v483, %v1100
        %v1102 = vpop.f32.mrf.mxu0
        %v1103 = vadd.f32 %v488, %v1102
        %v1104 = vpop.f32.mrf.mxu0
        %v1105 = vadd.f32 %v488, %v1104
        %1106 = vmatprep.mubr.bf16.mxu0 0
        %1107 = vmatmul.mubr.bf16.gmra.mxu0 %v902
        %v1108 = vpop.f32.mrf.mxu0
        %v1109 = vadd.f32 %v493, %v1108
        %v1110 = vpop.f32.mrf.mxu0
        %v1111 = vadd.f32 %v493, %v1110
        %v1112 = vpop.f32.mrf.mxu0
        %v1113 = vadd.f32 %v498, %v1112
        %v1114 = vpop.f32.mrf.mxu0
        %v1115 = vadd.f32 %v498, %v1114
        %1116 = vmatprep.mubr.bf16.mxu0 0
        %1117 = vmatmul.mubr.bf16.gmra.mxu0 %v905
        %v1118 = vpop.f32.mrf.mxu0
        %v1119 = vadd.f32 %v503, %v1118
        %v1120 = vpop.f32.mrf.mxu0
        %v1121 = vadd.f32 %v503, %v1120
        %v1122 = vpop.f32.mrf.mxu0
        %v1123 = vadd.f32 %v508, %v1122
        %v1124 = vpop.f32.mrf.mxu0
        %v1125 = vadd.f32 %v508, %v1124
        %1126 = vmatprep.mubr.bf16.mxu0 0
        %1127 = vmatmul.mubr.bf16.gmra.mxu0 %v908
        %v1128 = vpop.f32.mrf.mxu0
        %v1129 = vadd.f32 %v513, %v1128
        %v1130 = vpop.f32.mrf.mxu0
        %v1131 = vadd.f32 %v513, %v1130
        %v1132 = vpop.f32.mrf.mxu0
        %v1133 = vadd.f32 %v518, %v1132
        %v1134 = vpop.f32.mrf.mxu0
        %v1135 = vadd.f32 %v518, %v1134
        %1136 = vmatprep.mubr.bf16.mxu0 0
        %1137 = vmatmul.mubr.bf16.gmra.mxu0 %v911
        %v1138 = vpop.f32.mrf.mxu0
        %v1139 = vadd.f32 %v523, %v1138
        %v1140 = vpop.f32.mrf.mxu0
        %v1141 = vadd.f32 %v523, %v1140
        %v1142 = vpop.f32.mrf.mxu0
        %v1143 = vadd.f32 %v528, %v1142
        %v1144 = vpop.f32.mrf.mxu0
        %v1145 = vadd.f32 %v528, %v1144
        %1146 = vmatprep.mubr.bf16.mxu0 0
        %1147 = vmatmul.mubr.bf16.gmra.mxu0 %v914
        %v1148 = vpop.f32.mrf.mxu0
        %v1149 = vadd.f32 %v533, %v1148
        %v1150 = vpop.f32.mrf.mxu0
        %v1151 = vadd.f32 %v533, %v1150
        %v1152 = vpop.f32.mrf.mxu0
        %v1153 = vadd.f32 %v538, %v1152
        %v1154 = vpop.f32.mrf.mxu0
        %v1155 = vadd.f32 %v538, %v1154
        %1156 = vmatprep.mubr.bf16.mxu0 0
        %1157 = vmatmul.mubr.bf16.gmra.mxu0 %v917
        %v1158 = vpop.f32.mrf.mxu0
        %v1159 = vadd.f32 %v543, %v1158
        %v1160 = vpop.f32.mrf.mxu0
        %v1161 = vadd.f32 %v543, %v1160
        %v1162 = vpop.f32.mrf.mxu0
        %v1163 = vadd.f32 %v548, %v1162
        %v1164 = vpop.f32.mrf.mxu0
        %v1165 = vadd.f32 %v548, %v1164
        %1166 = vmatprep.mubr.bf16.mxu0 0
        %1167 = vmatmul.mubr.bf16.gmra.mxu0 %v920
        %v1168 = vpop.f32.mrf.mxu0
        %v1169 = vadd.f32 %v553, %v1168
        %v1170 = vpop.f32.mrf.mxu0
        %v1171 = vadd.f32 %v553, %v1170
        %v1172 = vpop.f32.mrf.mxu0
        %v1173 = vadd.f32 %v558, %v1172
        %v1174 = vpop.f32.mrf.mxu0
        %v1175 = vadd.f32 %v558, %v1174
        %1176 = vmatprep.mubr.bf16.mxu0 0
        %1177 = vmatmul.mubr.bf16.gmra.mxu0 %v923
        %v1178 = vpop.f32.mrf.mxu0
        %v1179 = vadd.f32 %v563, %v1178
        %v1180 = vpop.f32.mrf.mxu0
        %v1181 = vadd.f32 %v563, %v1180
        %v1182 = vpop.f32.mrf.mxu0
        %v1183 = vadd.f32 %v568, %v1182
        %v1184 = vpop.f32.mrf.mxu0
        %v1185 = vadd.f32 %v568, %v1184
        %1186 = vmatprep.mubr.bf16.mxu0 0
        %1187 = vmatmul.mubr.bf16.gmra.mxu0 %v926
        %v1188 = vpop.f32.mrf.mxu0
        %v1189 = vadd.f32 %v573, %v1188
        %v1190 = vpop.f32.mrf.mxu0
        %v1191 = vadd.f32 %v573, %v1190
        %v1192 = vpop.f32.mrf.mxu0
        %v1193 = vadd.f32 %v578, %v1192
        %v1194 = vpop.f32.mrf.mxu0
        %v1195 = vadd.f32 %v578, %v1194
        %1196 = vmatprep.mubr.bf16.mxu0 0
        %1197 = vmatmul.mubr.bf16.gmra.mxu0 %v929
        %v1198 = vpop.f32.mrf.mxu0
        %v1199 = vadd.f32 %v583, %v1198
        %v1200 = vpop.f32.mrf.mxu0
        %v1201 = vadd.f32 %v583, %v1200
        %v1202 = vpop.f32.mrf.mxu0
        %v1203 = vadd.f32 %v588, %v1202
        %v1204 = vpop.f32.mrf.mxu0
        %v1205 = vadd.f32 %v588, %v1204
        %1206 = vmatprep.mubr.bf16.mxu0 0
        %1207 = vmatmul.mubr.bf16.gmra.mxu0 %v932
        %v1208 = vpop.f32.mrf.mxu0
        %v1209 = vadd.f32 %v593, %v1208
        %v1210 = vpop.f32.mrf.mxu0
        %v1211 = vadd.f32 %v593, %v1210
        %v1212 = vpop.f32.mrf.mxu0
        %v1213 = vadd.f32 %v598, %v1212
        %v1214 = vpop.f32.mrf.mxu0
        %v1215 = vadd.f32 %v598, %v1214
        %1216 = vmatprep.mubr.bf16.mxu0 0
        %1217 = vmatmul.mubr.bf16.gmra.mxu0 %v935
        %v1218 = vpop.f32.mrf.mxu0
        %v1219 = vadd.f32 %v603, %v1218
        %v1220 = vpop.f32.mrf.mxu0
        %v1221 = vadd.f32 %v603, %v1220
        %v1222 = vpop.f32.mrf.mxu0
        %v1223 = vadd.f32 %v608, %v1222
        %v1224 = vpop.f32.mrf.mxu0
        %v1225 = vadd.f32 %v608, %v1224
        %1226 = vmatprep.mubr.bf16.mxu0 0
        %1227 = vmatmul.mubr.bf16.gmra.mxu0 %v938
        %v1228 = vpop.f32.mrf.mxu0
        %v1229 = vadd.f32 %v613, %v1228
        %v1230 = vpop.f32.mrf.mxu0
        %v1231 = vadd.f32 %v613, %v1230
        %v1232 = vpop.f32.mrf.mxu0
        %v1233 = vadd.f32 %v618, %v1232
        %v1234 = vpop.f32.mrf.mxu0
        %v1235 = vadd.f32 %v618, %v1234
        %1236 = vmatprep.mubr.bf16.mxu0 0
        %1237 = vmatmul.mubr.bf16.gmra.mxu0 %v941
        %v1238 = vpop.f32.mrf.mxu0
        %v1239 = vadd.f32 %v623, %v1238
        %v1240 = vpop.f32.mrf.mxu0
        %v1241 = vadd.f32 %v623, %v1240
        %v1242 = vpop.f32.mrf.mxu0
        %v1243 = vadd.f32 %v628, %v1242
        %v1244 = vpop.f32.mrf.mxu0
        %v1245 = vadd.f32 %v628, %v1244
        %1246 = vmatprep.mubr.bf16.mxu0 0
        %1247 = vmatmul.mubr.bf16.gmra.mxu0 %v944
        %v1248 = vpop.f32.mrf.mxu0
        %v1249 = vadd.f32 %v633, %v1248
        %v1250 = vpop.f32.mrf.mxu0
        %v1251 = vadd.f32 %v633, %v1250
        %v1252 = vpop.f32.mrf.mxu0
        %v1253 = vadd.f32 %v638, %v1252
        %v1254 = vpop.f32.mrf.mxu0
        %v1255 = vadd.f32 %v638, %v1254
        %1256 = vmatprep.mubr.bf16.mxu0 0
        %1257 = vmatmul.mubr.bf16.gmra.mxu0 %v947
        %v1258 = vpop.f32.mrf.mxu0
        %v1259 = vadd.f32 %v643, %v1258
        %v1260 = vpop.f32.mrf.mxu0
        %v1261 = vadd.f32 %v643, %v1260
        %v1262 = vpop.f32.mrf.mxu0
        %v1263 = vadd.f32 %v648, %v1262
        %v1264 = vpop.f32.mrf.mxu0
        %v1265 = vadd.f32 %v648, %v1264
        %1266 = vmatprep.mubr.bf16.mxu0 0
        %1267 = vmatmul.mubr.bf16.gmra.mxu0 %v950
        %v1268 = vpop.f32.mrf.mxu0
        %v1269 = vadd.f32 %v653, %v1268
        %v1270 = vpop.f32.mrf.mxu0
        %v1271 = vadd.f32 %v653, %v1270
        %v1272 = vpop.f32.mrf.mxu0
        %v1273 = vadd.f32 %v658, %v1272
        %v1274 = vpop.f32.mrf.mxu0
        %v1275 = vadd.f32 %v658, %v1274
        %1276 = vmatprep.mubr.bf16.mxu0 0
        %1277 = vmatmul.mubr.bf16.gmra.mxu0 %v953
        %v1278 = vpop.f32.mrf.mxu0
        %v1279 = vadd.f32 %v663, %v1278
        %v1280 = vpop.f32.mrf.mxu0
        %v1281 = vadd.f32 %v663, %v1280
        %v1282 = vpop.f32.mrf.mxu0
        %v1283 = vadd.f32 %v668, %v1282
        %v1284 = vpop.f32.mrf.mxu0
        %v1285 = vadd.f32 %v668, %v1284
        %1286 = vmatprep.mubr.bf16.mxu0 0
        %1287 = vmatmul.mubr.bf16.gmra.mxu0 %v956
        %v1288 = vpop.f32.mrf.mxu0
        %v1289 = vadd.f32 %v673, %v1288
        %v1290 = vpop.f32.mrf.mxu0
        %v1291 = vadd.f32 %v673, %v1290
        %v1292 = vpop.f32.mrf.mxu0
        %v1293 = vadd.f32 %v678, %v1292
        %v1294 = vpop.f32.mrf.mxu0
        %v1295 = vadd.f32 %v678, %v1294
        %1296 = vmatprep.mubr.bf16.mxu0 0
        %1297 = vmatmul.mubr.bf16.gmra.mxu0 %v959
        %v1298 = vpop.f32.mrf.mxu0
        %v1299 = vadd.f32 %v683, %v1298
        %v1300 = vpop.f32.mrf.mxu0
        %v1301 = vadd.f32 %v683, %v1300
        %v1302 = vpop.f32.mrf.mxu0
        %v1303 = vadd.f32 %v688, %v1302
        %v1304 = vpop.f32.mrf.mxu0
        %v1305 = vadd.f32 %v688, %v1304
        %1306 = vmatprep.mubr.bf16.mxu0 0
        %1307 = vmatmul.mubr.bf16.gmra.mxu0 %v962
        %v1308 = vpop.f32.mrf.mxu0
        %v1309 = vadd.f32 %v693, %v1308
        %v1310 = vpop.f32.mrf.mxu0
        %v1311 = vadd.f32 %v693, %v1310
        %v1312 = vpop.f32.mrf.mxu0
        %v1313 = vadd.f32 %v698, %v1312
        %v1314 = vpop.f32.mrf.mxu0
        %v1315 = vadd.f32 %v698, %v1314
        %1316 = vmatprep.mubr.bf16.mxu0 0
        %1317 = vmatmul.mubr.bf16.gmra.mxu0 %v965
        %v1318 = vpop.f32.mrf.mxu0
        %v1319 = vadd.f32 %v703, %v1318
        %v1320 = vpop.f32.mrf.mxu0
        %v1321 = vadd.f32 %v703, %v1320
        %v1322 = vpop.f32.mrf.mxu0
        %v1323 = vadd.f32 %v708, %v1322
        %v1324 = vpop.f32.mrf.mxu0
        %v1325 = vadd.f32 %v708, %v1324
        %1326 = vdwg.mxu0
        %v1327 = vmax.f32 %v1009, 0.0
        %v1328 = vmax.f32 %v1011, 0.0
        %v1329 = vmax.f32 %v1013, 0.0
        %v1330 = vmax.f32 %v1015, 0.0
        %v1331 = vmax.f32 %v1019, 0.0
        %v1332 = vmax.f32 %v1021, 0.0
        %v1333 = vmax.f32 %v1023, 0.0
        %v1334 = vmax.f32 %v1025, 0.0
        %v1335 = vmax.f32 %v1029, 0.0
        %v1336 = vmax.f32 %v1031, 0.0
        %v1337 = vmax.f32 %v1033, 0.0
        %v1338 = vmax.f32 %v1035, 0.0
        %v1339 = vmax.f32 %v1039, 0.0
        %v1340 = vmax.f32 %v1041, 0.0
        %v1341 = vmax.f32 %v1043, 0.0
        %v1342 = vmax.f32 %v1045, 0.0
        %v1343 = vmax.f32 %v1049, 0.0
        %v1344 = vmax.f32 %v1051, 0.0
        %v1345 = vmax.f32 %v1053, 0.0
        %v1346 = vmax.f32 %v1055, 0.0
        %v1347 = vmax.f32 %v1059, 0.0
        %v1348 = vmax.f32 %v1061, 0.0
        %v1349 = vmax.f32 %v1063, 0.0
        %v1350 = vmax.f32 %v1065, 0.0
        %v1351 = vmax.f32 %v1069, 0.0
        %v1352 = vmax.f32 %v1071, 0.0
        %v1353 = vmax.f32 %v1073, 0.0
        %v1354 = vmax.f32 %v1075, 0.0
        %v1355 = vmax.f32 %v1079, 0.0
        %v1356 = vmax.f32 %v1081, 0.0
        %v1357 = vmax.f32 %v1083, 0.0
        %v1358 = vmax.f32 %v1085, 0.0
        %v1359 = vmax.f32 %v1089, 0.0
        %v1360 = vmax.f32 %v1091, 0.0
        %v1361 = vmax.f32 %v1093, 0.0
        %v1362 = vmax.f32 %v1095, 0.0
        %v1363 = vmax.f32 %v1099, 0.0
        %v1364 = vmax.f32 %v1101, 0.0
        %v1365 = vmax.f32 %v1103, 0.0
        %v1366 = vmax.f32 %v1105, 0.0
        %v1367 = vmax.f32 %v1109, 0.0
        %v1368 = vmax.f32 %v1111, 0.0
        %v1369 = vmax.f32 %v1113, 0.0
        %v1370 = vmax.f32 %v1115, 0.0
        %v1371 = vmax.f32 %v1119, 0.0
        %v1372 = vmax.f32 %v1121, 0.0
        %v1373 = vmax.f32 %v1123, 0.0
        %v1374 = vmax.f32 %v1125, 0.0
        %v1375 = vmax.f32 %v1129, 0.0
        %v1376 = vmax.f32 %v1131, 0.0
        %v1377 = vmax.f32 %v1133, 0.0
        %v1378 = vmax.f32 %v1135, 0.0
        %v1379 = vmax.f32 %v1139, 0.0
        %v1380 = vmax.f32 %v1141, 0.0
        %v1381 = vmax.f32 %v1143, 0.0
        %v1382 = vmax.f32 %v1145, 0.0
        %v1383 = vmax.f32 %v1149, 0.0
        %v1384 = vmax.f32 %v1151, 0.0
        %v1385 = vmax.f32 %v1153, 0.0
        %v1386 = vmax.f32 %v1155, 0.0
        %v1387 = vmax.f32 %v1159, 0.0
        %v1388 = vmax.f32 %v1161, 0.0
        %v1389 = vmax.f32 %v1163, 0.0
        %v1390 = vmax.f32 %v1165, 0.0
        %v1391 = vmax.f32 %v1169, 0.0
        %v1392 = vmax.f32 %v1171, 0.0
        %v1393 = vmax.f32 %v1173, 0.0
        %v1394 = vmax.f32 %v1175, 0.0
        %v1395 = vmax.f32 %v1179, 0.0
        %v1396 = vmax.f32 %v1181, 0.0
        %v1397 = vmax.f32 %v1183, 0.0
        %v1398 = vmax.f32 %v1185, 0.0
        %v1399 = vmax.f32 %v1189, 0.0
        %v1400 = vmax.f32 %v1191, 0.0
        %v1401 = vmax.f32 %v1193, 0.0
        %v1402 = vmax.f32 %v1195, 0.0
        %v1403 = vmax.f32 %v1199, 0.0
        %v1404 = vmax.f32 %v1201, 0.0
        %v1405 = vmax.f32 %v1203, 0.0
        %v1406 = vmax.f32 %v1205, 0.0
        %v1407 = vmax.f32 %v1209, 0.0
        %v1408 = vmax.f32 %v1211, 0.0
        %v1409 = vmax.f32 %v1213, 0.0
        %v1410 = vmax.f32 %v1215, 0.0
        %v1411 = vmax.f32 %v1219, 0.0
        %v1412 = vmax.f32 %v1221, 0.0
        %v1413 = vmax.f32 %v1223, 0.0
        %v1414 = vmax.f32 %v1225, 0.0
        %v1415 = vmax.f32 %v1229, 0.0
        %v1416 = vmax.f32 %v1231, 0.0
        %v1417 = vmax.f32 %v1233, 0.0
        %v1418 = vmax.f32 %v1235, 0.0
        %v1419 = vmax.f32 %v1239, 0.0
        %v1420 = vmax.f32 %v1241, 0.0
        %v1421 = vmax.f32 %v1243, 0.0
        %v1422 = vmax.f32 %v1245, 0.0
        %v1423 = vmax.f32 %v1249, 0.0
        %v1424 = vmax.f32 %v1251, 0.0
        %v1425 = vmax.f32 %v1253, 0.0
        %v1426 = vmax.f32 %v1255, 0.0
        %v1427 = vmax.f32 %v1259, 0.0
        %v1428 = vmax.f32 %v1261, 0.0
        %v1429 = vmax.f32 %v1263, 0.0
        %v1430 = vmax.f32 %v1265, 0.0
        %v1431 = vmax.f32 %v1269, 0.0
        %v1432 = vmax.f32 %v1271, 0.0
        %v1433 = vmax.f32 %v1273, 0.0
        %v1434 = vmax.f32 %v1275, 0.0
        %v1435 = vmax.f32 %v1279, 0.0
        %v1436 = vmax.f32 %v1281, 0.0
        %v1437 = vmax.f32 %v1283, 0.0
        %v1438 = vmax.f32 %v1285, 0.0
        %v1439 = vmax.f32 %v1289, 0.0
        %v1440 = vmax.f32 %v1291, 0.0
        %v1441 = vmax.f32 %v1293, 0.0
        %v1442 = vmax.f32 %v1295, 0.0
        %v1443 = vmax.f32 %v1299, 0.0
        %v1444 = vmax.f32 %v1301, 0.0
        %v1445 = vmax.f32 %v1303, 0.0
        %v1446 = vmax.f32 %v1305, 0.0
        %v1447 = vmax.f32 %v1309, 0.0
        %v1448 = vmax.f32 %v1311, 0.0
        %v1449 = vmax.f32 %v1313, 0.0
        %v1450 = vmax.f32 %v1315, 0.0
        %v1451 = vmax.f32 %v1319, 0.0
        %v1452 = vmax.f32 %v1321, 0.0
        %v1453 = vmax.f32 %v1323, 0.0
        %v1454 = vmax.f32 %v1325, 0.0
        %v1455 = vld [vmem:[%s3] sm:$0xff]
        %v1456 = vld [vmem:[%s3 + $0x8] sm:$0xff]
        %v1457 = vld [vmem:[%s3 + $0x10] sm:$0xff]
        %v1458 = vld [vmem:[%s3 + $0x18] sm:$0xff]
        %v1459 = vld [vmem:[%s3 + $0x20] sm:$0xff]
        %v1460 = vld [vmem:[%s3 + $0x28] sm:$0xff]
        %v1461 = vld [vmem:[%s3 + $0x30] sm:$0xff]
        %v1462 = vld [vmem:[%s3 + $0x38] sm:$0xff]
        %v1463 = vld [vmem:[%s3 + $0x40] sm:$0xff]
        %v1464 = vld [vmem:[%s3 + $0x48] sm:$0xff]
        %v1465 = vld [vmem:[%s3 + $0x50] sm:$0xff]
        %v1466 = vld [vmem:[%s3 + $0x58] sm:$0xff]
        %v1467 = vld [vmem:[%s3 + $0x60] sm:$0xff]
        %v1468 = vld [vmem:[%s3 + $0x68] sm:$0xff]
        %v1469 = vld [vmem:[%s3 + $0x70] sm:$0xff]
        %v1470 = vld [vmem:[%s3 + $0x78] sm:$0xff]
        %v1471 = vld [vmem:[%s3 + $0x80] sm:$0xff]
        %v1472 = vld [vmem:[%s3 + $0x88] sm:$0xff]
        %v1473 = vld [vmem:[%s3 + $0x90] sm:$0xff]
        %v1474 = vld [vmem:[%s3 + $0x98] sm:$0xff]
        %v1475 = vld [vmem:[%s3 + $0xa0] sm:$0xff]
        %v1476 = vld [vmem:[%s3 + $0xa8] sm:$0xff]
        %v1477 = vld [vmem:[%s3 + $0xb0] sm:$0xff]
        %v1478 = vld [vmem:[%s3 + $0xb8] sm:$0xff]
        %v1479 = vld [vmem:[%s3 + $0xc0] sm:$0xff]
        %v1480 = vld [vmem:[%s3 + $0xc8] sm:$0xff]
        %v1481 = vld [vmem:[%s3 + $0xd0] sm:$0xff]
        %v1482 = vld [vmem:[%s3 + $0xd8] sm:$0xff]
        %v1483 = vld [vmem:[%s3 + $0xe0] sm:$0xff]
        %v1484 = vld [vmem:[%s3 + $0xe8] sm:$0xff]
        %v1485 = vld [vmem:[%s3 + $0xf0] sm:$0xff]
        %v1486 = vld [vmem:[%s3 + $0xf8] sm:$0xff]
        %v1487 = vld [vmem:[%s3 + $0x100] sm:$0xff]
        %v1488 = vld [vmem:[%s3 + $0x108] sm:$0xff]
        %v1489 = vld [vmem:[%s3 + $0x110] sm:$0xff]
        %v1490 = vld [vmem:[%s3 + $0x118] sm:$0xff]
        %v1491 = vld [vmem:[%s3 + $0x120] sm:$0xff]
        %v1492 = vld [vmem:[%s3 + $0x128] sm:$0xff]
        %v1493 = vld [vmem:[%s3 + $0x130] sm:$0xff]
        %v1494 = vld [vmem:[%s3 + $0x138] sm:$0xff]
        %v1495 = vld [vmem:[%s3 + $0x140] sm:$0xff]
        %v1496 = vld [vmem:[%s3 + $0x148] sm:$0xff]
        %v1497 = vld [vmem:[%s3 + $0x150] sm:$0xff]
        %v1498 = vld [vmem:[%s3 + $0x158] sm:$0xff]
        %v1499 = vld [vmem:[%s3 + $0x160] sm:$0xff]
        %v1500 = vld [vmem:[%s3 + $0x168] sm:$0xff]
        %v1501 = vld [vmem:[%s3 + $0x170] sm:$0xff]
        %v1502 = vld [vmem:[%s3 + $0x178] sm:$0xff]
        %v1503 = vld [vmem:[%s3 + $0x180] sm:$0xff]
        %v1504 = vld [vmem:[%s3 + $0x188] sm:$0xff]
        %v1505 = vld [vmem:[%s3 + $0x190] sm:$0xff]
        %v1506 = vld [vmem:[%s3 + $0x198] sm:$0xff]
        %v1507 = vld [vmem:[%s3 + $0x1a0] sm:$0xff]
        %v1508 = vld [vmem:[%s3 + $0x1a8] sm:$0xff]
        %v1509 = vld [vmem:[%s3 + $0x1b0] sm:$0xff]
        %v1510 = vld [vmem:[%s3 + $0x1b8] sm:$0xff]
        %v1511 = vld [vmem:[%s3 + $0x1c0] sm:$0xff]
        %v1512 = vld [vmem:[%s3 + $0x1c8] sm:$0xff]
        %v1513 = vld [vmem:[%s3 + $0x1d0] sm:$0xff]
        %v1514 = vld [vmem:[%s3 + $0x1d8] sm:$0xff]
        %v1515 = vld [vmem:[%s3 + $0x1e0] sm:$0xff]
        %v1516 = vld [vmem:[%s3 + $0x1e8] sm:$0xff]
        %v1517 = vld [vmem:[%s3 + $0x1f0] sm:$0xff]
        %v1518 = vld [vmem:[%s3 + $0x1f8] sm:$0xff]
        %1520 = vset.pattern.permute.xlu0 0
        %1521 = vperm.xlu0 %1520, %v1455
        %v1522 = vpop.permute.xlu0 %1521
        %1525 = vset.pattern.permute.xlu0 0
        %1526 = vperm.xlu0 %1525, %v1456
        %v1527 = vpop.permute.xlu0 %1526
        %1530 = vset.pattern.permute.xlu0 0
        %1531 = vperm.xlu0 %1530, %v1457
        %v1532 = vpop.permute.xlu0 %1531
        %1535 = vset.pattern.permute.xlu0 0
        %1536 = vperm.xlu0 %1535, %v1458
        %v1537 = vpop.permute.xlu0 %1536
        %1540 = vset.pattern.permute.xlu0 0
        %1541 = vperm.xlu0 %1540, %v1459
        %v1542 = vpop.permute.xlu0 %1541
        %1545 = vset.pattern.permute.xlu0 0
        %1546 = vperm.xlu0 %1545, %v1460
        %v1547 = vpop.permute.xlu0 %1546
        %1550 = vset.pattern.permute.xlu0 0
        %1551 = vperm.xlu0 %1550, %v1461
        %v1552 = vpop.permute.xlu0 %1551
        %1555 = vset.pattern.permute.xlu0 0
        %1556 = vperm.xlu0 %1555, %v1462
        %v1557 = vpop.permute.xlu0 %1556
        %1560 = vset.pattern.permute.xlu0 0
        %1561 = vperm.xlu0 %1560, %v1463
        %v1562 = vpop.permute.xlu0 %1561
        %1565 = vset.pattern.permute.xlu0 0
        %1566 = vperm.xlu0 %1565, %v1464
        %v1567 = vpop.permute.xlu0 %1566
        %1570 = vset.pattern.permute.xlu0 0
        %1571 = vperm.xlu0 %1570, %v1465
        %v1572 = vpop.permute.xlu0 %1571
        %1575 = vset.pattern.permute.xlu0 0
        %1576 = vperm.xlu0 %1575, %v1466
        %v1577 = vpop.permute.xlu0 %1576
        %1580 = vset.pattern.permute.xlu0 0
        %1581 = vperm.xlu0 %1580, %v1467
        %v1582 = vpop.permute.xlu0 %1581
        %1585 = vset.pattern.permute.xlu0 0
        %1586 = vperm.xlu0 %1585, %v1468
        %v1587 = vpop.permute.xlu0 %1586
        %1590 = vset.pattern.permute.xlu0 0
        %1591 = vperm.xlu0 %1590, %v1469
        %v1592 = vpop.permute.xlu0 %1591
        %1595 = vset.pattern.permute.xlu0 0
        %1596 = vperm.xlu0 %1595, %v1470
        %v1597 = vpop.permute.xlu0 %1596
        %1600 = vset.pattern.permute.xlu0 0
        %1601 = vperm.xlu0 %1600, %v1471
        %v1602 = vpop.permute.xlu0 %1601
        %1605 = vset.pattern.permute.xlu0 0
        %1606 = vperm.xlu0 %1605, %v1472
        %v1607 = vpop.permute.xlu0 %1606
        %1610 = vset.pattern.permute.xlu0 0
        %1611 = vperm.xlu0 %1610, %v1473
        %v1612 = vpop.permute.xlu0 %1611
        %1615 = vset.pattern.permute.xlu0 0
        %1616 = vperm.xlu0 %1615, %v1474
        %v1617 = vpop.permute.xlu0 %1616
        %1620 = vset.pattern.permute.xlu0 0
        %1621 = vperm.xlu0 %1620, %v1475
        %v1622 = vpop.permute.xlu0 %1621
        %1625 = vset.pattern.permute.xlu0 0
        %1626 = vperm.xlu0 %1625, %v1476
        %v1627 = vpop.permute.xlu0 %1626
        %1630 = vset.pattern.permute.xlu0 0
        %1631 = vperm.xlu0 %1630, %v1477
        %v1632 = vpop.permute.xlu0 %1631
        %1635 = vset.pattern.permute.xlu0 0
        %1636 = vperm.xlu0 %1635, %v1478
        %v1637 = vpop.permute.xlu0 %1636
        %1640 = vset.pattern.permute.xlu0 0
        %1641 = vperm.xlu0 %1640, %v1479
        %v1642 = vpop.permute.xlu0 %1641
        %1645 = vset.pattern.permute.xlu0 0
        %1646 = vperm.xlu0 %1645, %v1480
        %v1647 = vpop.permute.xlu0 %1646
        %1650 = vset.pattern.permute.xlu0 0
        %1651 = vperm.xlu0 %1650, %v1481
        %v1652 = vpop.permute.xlu0 %1651
        %1655 = vset.pattern.permute.xlu0 0
        %1656 = vperm.xlu0 %1655, %v1482
        %v1657 = vpop.permute.xlu0 %1656
        %1660 = vset.pattern.permute.xlu0 0
        %1661 = vperm.xlu0 %1660, %v1483
        %v1662 = vpop.permute.xlu0 %1661
        %1665 = vset.pattern.permute.xlu0 0
        %1666 = vperm.xlu0 %1665, %v1484
        %v1667 = vpop.permute.xlu0 %1666
        %1670 = vset.pattern.permute.xlu0 0
        %1671 = vperm.xlu0 %1670, %v1485
        %v1672 = vpop.permute.xlu0 %1671
        %1675 = vset.pattern.permute.xlu0 0
        %1676 = vperm.xlu0 %1675, %v1486
        %v1677 = vpop.permute.xlu0 %1676
        %1680 = vset.pattern.permute.xlu0 0
        %1681 = vperm.xlu0 %1680, %v1487
        %v1682 = vpop.permute.xlu0 %1681
        %1685 = vset.pattern.permute.xlu0 0
        %1686 = vperm.xlu0 %1685, %v1488
        %v1687 = vpop.permute.xlu0 %1686
        %1690 = vset.pattern.permute.xlu0 0
        %1691 = vperm.xlu0 %1690, %v1489
        %v1692 = vpop.permute.xlu0 %1691
        %1695 = vset.pattern.permute.xlu0 0
        %1696 = vperm.xlu0 %1695, %v1490
        %v1697 = vpop.permute.xlu0 %1696
        %1700 = vset.pattern.permute.xlu0 0
        %1701 = vperm.xlu0 %1700, %v1491
        %v1702 = vpop.permute.xlu0 %1701
        %1705 = vset.pattern.permute.xlu0 0
        %1706 = vperm.xlu0 %1705, %v1492
        %v1707 = vpop.permute.xlu0 %1706
        %1710 = vset.pattern.permute.xlu0 0
        %1711 = vperm.xlu0 %1710, %v1493
        %v1712 = vpop.permute.xlu0 %1711
        %1715 = vset.pattern.permute.xlu0 0
        %1716 = vperm.xlu0 %1715, %v1494
        %v1717 = vpop.permute.xlu0 %1716
        %1720 = vset.pattern.permute.xlu0 0
        %1721 = vperm.xlu0 %1720, %v1495
        %v1722 = vpop.permute.xlu0 %1721
        %1725 = vset.pattern.permute.xlu0 0
        %1726 = vperm.xlu0 %1725, %v1496
        %v1727 = vpop.permute.xlu0 %1726
        %1730 = vset.pattern.permute.xlu0 0
        %1731 = vperm.xlu0 %1730, %v1497
        %v1732 = vpop.permute.xlu0 %1731
        %1735 = vset.pattern.permute.xlu0 0
        %1736 = vperm.xlu0 %1735, %v1498
        %v1737 = vpop.permute.xlu0 %1736
        %1740 = vset.pattern.permute.xlu0 0
        %1741 = vperm.xlu0 %1740, %v1499
        %v1742 = vpop.permute.xlu0 %1741
        %1745 = vset.pattern.permute.xlu0 0
        %1746 = vperm.xlu0 %1745, %v1500
        %v1747 = vpop.permute.xlu0 %1746
        %1750 = vset.pattern.permute.xlu0 0
        %1751 = vperm.xlu0 %1750, %v1501
        %v1752 = vpop.permute.xlu0 %1751
        %1755 = vset.pattern.permute.xlu0 0
        %1756 = vperm.xlu0 %1755, %v1502
        %v1757 = vpop.permute.xlu0 %1756
        %1760 = vset.pattern.permute.xlu0 0
        %1761 = vperm.xlu0 %1760, %v1503
        %v1762 = vpop.permute.xlu0 %1761
        %1765 = vset.pattern.permute.xlu0 0
        %1766 = vperm.xlu0 %1765, %v1504
        %v1767 = vpop.permute.xlu0 %1766
        %1770 = vset.pattern.permute.xlu0 0
        %1771 = vperm.xlu0 %1770, %v1505
        %v1772 = vpop.permute.xlu0 %1771
        %1775 = vset.pattern.permute.xlu0 0
        %1776 = vperm.xlu0 %1775, %v1506
        %v1777 = vpop.permute.xlu0 %1776
        %1780 = vset.pattern.permute.xlu0 0
        %1781 = vperm.xlu0 %1780, %v1507
        %v1782 = vpop.permute.xlu0 %1781
        %1785 = vset.pattern.permute.xlu0 0
        %1786 = vperm.xlu0 %1785, %v1508
        %v1787 = vpop.permute.xlu0 %1786
        %1790 = vset.pattern.permute.xlu0 0
        %1791 = vperm.xlu0 %1790, %v1509
        %v1792 = vpop.permute.xlu0 %1791
        %1795 = vset.pattern.permute.xlu0 0
        %1796 = vperm.xlu0 %1795, %v1510
        %v1797 = vpop.permute.xlu0 %1796
        %1800 = vset.pattern.permute.xlu0 0
        %1801 = vperm.xlu0 %1800, %v1511
        %v1802 = vpop.permute.xlu0 %1801
        %1805 = vset.pattern.permute.xlu0 0
        %1806 = vperm.xlu0 %1805, %v1512
        %v1807 = vpop.permute.xlu0 %1806
        %1810 = vset.pattern.permute.xlu0 0
        %1811 = vperm.xlu0 %1810, %v1513
        %v1812 = vpop.permute.xlu0 %1811
        %1815 = vset.pattern.permute.xlu0 0
        %1816 = vperm.xlu0 %1815, %v1514
        %v1817 = vpop.permute.xlu0 %1816
        %1820 = vset.pattern.permute.xlu0 0
        %1821 = vperm.xlu0 %1820, %v1515
        %v1822 = vpop.permute.xlu0 %1821
        %1825 = vset.pattern.permute.xlu0 0
        %1826 = vperm.xlu0 %1825, %v1516
        %v1827 = vpop.permute.xlu0 %1826
        %1830 = vset.pattern.permute.xlu0 0
        %1831 = vperm.xlu0 %1830, %v1517
        %v1832 = vpop.permute.xlu0 %1831
        %1835 = vset.pattern.permute.xlu0 0
        %1836 = vperm.xlu0 %1835, %v1518
        %v1837 = vpop.permute.xlu0 %1836
        %v1839 = vmul.f32 %v1327, %v1522
        %v1840 = vmul.f32 %v1328, %v1522
        %v1841 = vmul.f32 %v1329, %v1527
        %v1842 = vmul.f32 %v1330, %v1527
        %v1843 = vmul.f32 %v1331, %v1532
        %v1844 = vmul.f32 %v1332, %v1532
        %v1845 = vmul.f32 %v1333, %v1537
        %v1846 = vmul.f32 %v1334, %v1537
        %v1847 = vmul.f32 %v1335, %v1542
        %v1848 = vmul.f32 %v1336, %v1542
        %v1849 = vmul.f32 %v1337, %v1547
        %v1850 = vmul.f32 %v1338, %v1547
        %v1851 = vmul.f32 %v1339, %v1552
        %v1852 = vmul.f32 %v1340, %v1552
        %v1853 = vmul.f32 %v1341, %v1557
        %v1854 = vmul.f32 %v1342, %v1557
        %v1855 = vmul.f32 %v1343, %v1562
        %v1856 = vmul.f32 %v1344, %v1562
        %v1857 = vmul.f32 %v1345, %v1567
        %v1858 = vmul.f32 %v1346, %v1567
        %v1859 = vmul.f32 %v1347, %v1572
        %v1860 = vmul.f32 %v1348, %v1572
        %v1861 = vmul.f32 %v1349, %v1577
        %v1862 = vmul.f32 %v1350, %v1577
        %v1863 = vmul.f32 %v1351, %v1582
        %v1864 = vmul.f32 %v1352, %v1582
        %v1865 = vmul.f32 %v1353, %v1587
        %v1866 = vmul.f32 %v1354, %v1587
        %v1867 = vmul.f32 %v1355, %v1592
        %v1868 = vmul.f32 %v1356, %v1592
        %v1869 = vmul.f32 %v1357, %v1597
        %v1870 = vmul.f32 %v1358, %v1597
        %v1871 = vmul.f32 %v1359, %v1602
        %v1872 = vmul.f32 %v1360, %v1602
        %v1873 = vmul.f32 %v1361, %v1607
        %v1874 = vmul.f32 %v1362, %v1607
        %v1875 = vmul.f32 %v1363, %v1612
        %v1876 = vmul.f32 %v1364, %v1612
        %v1877 = vmul.f32 %v1365, %v1617
        %v1878 = vmul.f32 %v1366, %v1617
        %v1879 = vmul.f32 %v1367, %v1622
        %v1880 = vmul.f32 %v1368, %v1622
        %v1881 = vmul.f32 %v1369, %v1627
        %v1882 = vmul.f32 %v1370, %v1627
        %v1883 = vmul.f32 %v1371, %v1632
        %v1884 = vmul.f32 %v1372, %v1632
        %v1885 = vmul.f32 %v1373, %v1637
        %v1886 = vmul.f32 %v1374, %v1637
        %v1887 = vmul.f32 %v1375, %v1642
        %v1888 = vmul.f32 %v1376, %v1642
        %v1889 = vmul.f32 %v1377, %v1647
        %v1890 = vmul.f32 %v1378, %v1647
        %v1891 = vmul.f32 %v1379, %v1652
        %v1892 = vmul.f32 %v1380, %v1652
        %v1893 = vmul.f32 %v1381, %v1657
        %v1894 = vmul.f32 %v1382, %v1657
        %v1895 = vmul.f32 %v1383, %v1662
        %v1896 = vmul.f32 %v1384, %v1662
        %v1897 = vmul.f32 %v1385, %v1667
        %v1898 = vmul.f32 %v1386, %v1667
        %v1899 = vmul.f32 %v1387, %v1672
        %v1900 = vmul.f32 %v1388, %v1672
        %v1901 = vmul.f32 %v1389, %v1677
        %v1902 = vmul.f32 %v1390, %v1677
        %v1903 = vmul.f32 %v1391, %v1682
        %v1904 = vmul.f32 %v1392, %v1682
        %v1905 = vmul.f32 %v1393, %v1687
        %v1906 = vmul.f32 %v1394, %v1687
        %v1907 = vmul.f32 %v1395, %v1692
        %v1908 = vmul.f32 %v1396, %v1692
        %v1909 = vmul.f32 %v1397, %v1697
        %v1910 = vmul.f32 %v1398, %v1697
        %v1911 = vmul.f32 %v1399, %v1702
        %v1912 = vmul.f32 %v1400, %v1702
        %v1913 = vmul.f32 %v1401, %v1707
        %v1914 = vmul.f32 %v1402, %v1707
        %v1915 = vmul.f32 %v1403, %v1712
        %v1916 = vmul.f32 %v1404, %v1712
        %v1917 = vmul.f32 %v1405, %v1717
        %v1918 = vmul.f32 %v1406, %v1717
        %v1919 = vmul.f32 %v1407, %v1722
        %v1920 = vmul.f32 %v1408, %v1722
        %v1921 = vmul.f32 %v1409, %v1727
        %v1922 = vmul.f32 %v1410, %v1727
        %v1923 = vmul.f32 %v1411, %v1732
        %v1924 = vmul.f32 %v1412, %v1732
        %v1925 = vmul.f32 %v1413, %v1737
        %v1926 = vmul.f32 %v1414, %v1737
        %v1927 = vmul.f32 %v1415, %v1742
        %v1928 = vmul.f32 %v1416, %v1742
        %v1929 = vmul.f32 %v1417, %v1747
        %v1930 = vmul.f32 %v1418, %v1747
        %v1931 = vmul.f32 %v1419, %v1752
        %v1932 = vmul.f32 %v1420, %v1752
        %v1933 = vmul.f32 %v1421, %v1757
        %v1934 = vmul.f32 %v1422, %v1757
        %v1935 = vmul.f32 %v1423, %v1762
        %v1936 = vmul.f32 %v1424, %v1762
        %v1937 = vmul.f32 %v1425, %v1767
        %v1938 = vmul.f32 %v1426, %v1767
        %v1939 = vmul.f32 %v1427, %v1772
        %v1940 = vmul.f32 %v1428, %v1772
        %v1941 = vmul.f32 %v1429, %v1777
        %v1942 = vmul.f32 %v1430, %v1777
        %v1943 = vmul.f32 %v1431, %v1782
        %v1944 = vmul.f32 %v1432, %v1782
        %v1945 = vmul.f32 %v1433, %v1787
        %v1946 = vmul.f32 %v1434, %v1787
        %v1947 = vmul.f32 %v1435, %v1792
        %v1948 = vmul.f32 %v1436, %v1792
        %v1949 = vmul.f32 %v1437, %v1797
        %v1950 = vmul.f32 %v1438, %v1797
        %v1951 = vmul.f32 %v1439, %v1802
        %v1952 = vmul.f32 %v1440, %v1802
        %v1953 = vmul.f32 %v1441, %v1807
        %v1954 = vmul.f32 %v1442, %v1807
        %v1955 = vmul.f32 %v1443, %v1812
        %v1956 = vmul.f32 %v1444, %v1812
        %v1957 = vmul.f32 %v1445, %v1817
        %v1958 = vmul.f32 %v1446, %v1817
        %v1959 = vmul.f32 %v1447, %v1822
        %v1960 = vmul.f32 %v1448, %v1822
        %v1961 = vmul.f32 %v1449, %v1827
        %v1962 = vmul.f32 %v1450, %v1827
        %v1963 = vmul.f32 %v1451, %v1832
        %v1964 = vmul.f32 %v1452, %v1832
        %v1965 = vmul.f32 %v1453, %v1837
        %v1966 = vmul.f32 %v1454, %v1837
        %v1967 = vadd.f32 %v1839, %v1841
        %v1968 = vadd.f32 %v1967, %v1843
        %v1969 = vadd.f32 %v1968, %v1845
        %v1970 = vadd.f32 %v1969, %v1847
        %v1971 = vadd.f32 %v1970, %v1849
        %v1972 = vadd.f32 %v1971, %v1851
        %v1973 = vadd.f32 %v1972, %v1853
        %v1974 = vadd.f32 %v1973, %v1855
        %v1975 = vadd.f32 %v1974, %v1857
        %v1976 = vadd.f32 %v1975, %v1859
        %v1977 = vadd.f32 %v1976, %v1861
        %v1978 = vadd.f32 %v1977, %v1863
        %v1979 = vadd.f32 %v1978, %v1865
        %v1980 = vadd.f32 %v1979, %v1867
        %v1981 = vadd.f32 %v1980, %v1869
        %v1982 = vadd.f32 %v1981, %v1871
        %v1983 = vadd.f32 %v1982, %v1873
        %v1984 = vadd.f32 %v1983, %v1875
        %v1985 = vadd.f32 %v1984, %v1877
        %v1986 = vadd.f32 %v1985, %v1879
        %v1987 = vadd.f32 %v1986, %v1881
        %v1988 = vadd.f32 %v1987, %v1883
        %v1989 = vadd.f32 %v1988, %v1885
        %v1990 = vadd.f32 %v1989, %v1887
        %v1991 = vadd.f32 %v1990, %v1889
        %v1992 = vadd.f32 %v1991, %v1891
        %v1993 = vadd.f32 %v1992, %v1893
        %v1994 = vadd.f32 %v1993, %v1895
        %v1995 = vadd.f32 %v1994, %v1897
        %v1996 = vadd.f32 %v1995, %v1899
        %v1997 = vadd.f32 %v1996, %v1901
        %v1998 = vadd.f32 %v1997, %v1903
        %v1999 = vadd.f32 %v1998, %v1905
        %v2000 = vadd.f32 %v1999, %v1907
        %v2001 = vadd.f32 %v2000, %v1909
        %v2002 = vadd.f32 %v2001, %v1911
        %v2003 = vadd.f32 %v2002, %v1913
        %v2004 = vadd.f32 %v2003, %v1915
        %v2005 = vadd.f32 %v2004, %v1917
        %v2006 = vadd.f32 %v2005, %v1919
        %v2007 = vadd.f32 %v2006, %v1921
        %v2008 = vadd.f32 %v2007, %v1923
        %v2009 = vadd.f32 %v2008, %v1925
        %v2010 = vadd.f32 %v2009, %v1927
        %v2011 = vadd.f32 %v2010, %v1929
        %v2012 = vadd.f32 %v2011, %v1931
        %v2013 = vadd.f32 %v2012, %v1933
        %v2014 = vadd.f32 %v2013, %v1935
        %v2015 = vadd.f32 %v2014, %v1937
        %v2016 = vadd.f32 %v2015, %v1939
        %v2017 = vadd.f32 %v2016, %v1941
        %v2018 = vadd.f32 %v2017, %v1943
        %v2019 = vadd.f32 %v2018, %v1945
        %v2020 = vadd.f32 %v2019, %v1947
        %v2021 = vadd.f32 %v2020, %v1949
        %v2022 = vadd.f32 %v2021, %v1951
        %v2023 = vadd.f32 %v2022, %v1953
        %v2024 = vadd.f32 %v2023, %v1955
        %v2025 = vadd.f32 %v2024, %v1957
        %v2026 = vadd.f32 %v2025, %v1959
        %v2027 = vadd.f32 %v2026, %v1961
        %v2028 = vadd.f32 %v2027, %v1963
        %v2029 = vadd.f32 %v2028, %v1965
        %v2030 = vrot.slane %v2029, 4
        %v2031 = vadd.f32 %v2029, %v2030
        %v2032 = vrot.slane %v2031, 2
        %v2033 = vadd.f32 %v2031, %v2032
        %v2034 = vrot.slane %v2033, 1
        %v2035 = vadd.f32 %v2033, %v2034
        %v2036 = vadd.f32 %v1840, %v1842
        %v2037 = vadd.f32 %v2036, %v1844
        %v2038 = vadd.f32 %v2037, %v1846
        %v2039 = vadd.f32 %v2038, %v1848
        %v2040 = vadd.f32 %v2039, %v1850
        %v2041 = vadd.f32 %v2040, %v1852
        %v2042 = vadd.f32 %v2041, %v1854
        %v2043 = vadd.f32 %v2042, %v1856
        %v2044 = vadd.f32 %v2043, %v1858
        %v2045 = vadd.f32 %v2044, %v1860
        %v2046 = vadd.f32 %v2045, %v1862
        %v2047 = vadd.f32 %v2046, %v1864
        %v2048 = vadd.f32 %v2047, %v1866
        %v2049 = vadd.f32 %v2048, %v1868
        %v2050 = vadd.f32 %v2049, %v1870
        %v2051 = vadd.f32 %v2050, %v1872
        %v2052 = vadd.f32 %v2051, %v1874
        %v2053 = vadd.f32 %v2052, %v1876
        %v2054 = vadd.f32 %v2053, %v1878
        %v2055 = vadd.f32 %v2054, %v1880
        %v2056 = vadd.f32 %v2055, %v1882
        %v2057 = vadd.f32 %v2056, %v1884
        %v2058 = vadd.f32 %v2057, %v1886
        %v2059 = vadd.f32 %v2058, %v1888
        %v2060 = vadd.f32 %v2059, %v1890
        %v2061 = vadd.f32 %v2060, %v1892
        %v2062 = vadd.f32 %v2061, %v1894
        %v2063 = vadd.f32 %v2062, %v1896
        %v2064 = vadd.f32 %v2063, %v1898
        %v2065 = vadd.f32 %v2064, %v1900
        %v2066 = vadd.f32 %v2065, %v1902
        %v2067 = vadd.f32 %v2066, %v1904
        %v2068 = vadd.f32 %v2067, %v1906
        %v2069 = vadd.f32 %v2068, %v1908
        %v2070 = vadd.f32 %v2069, %v1910
        %v2071 = vadd.f32 %v2070, %v1912
        %v2072 = vadd.f32 %v2071, %v1914
        %v2073 = vadd.f32 %v2072, %v1916
        %v2074 = vadd.f32 %v2073, %v1918
        %v2075 = vadd.f32 %v2074, %v1920
        %v2076 = vadd.f32 %v2075, %v1922
        %v2077 = vadd.f32 %v2076, %v1924
        %v2078 = vadd.f32 %v2077, %v1926
        %v2079 = vadd.f32 %v2078, %v1928
        %v2080 = vadd.f32 %v2079, %v1930
        %v2081 = vadd.f32 %v2080, %v1932
        %v2082 = vadd.f32 %v2081, %v1934
        %v2083 = vadd.f32 %v2082, %v1936
        %v2084 = vadd.f32 %v2083, %v1938
        %v2085 = vadd.f32 %v2084, %v1940
        %v2086 = vadd.f32 %v2085, %v1942
        %v2087 = vadd.f32 %v2086, %v1944
        %v2088 = vadd.f32 %v2087, %v1946
        %v2089 = vadd.f32 %v2088, %v1948
        %v2090 = vadd.f32 %v2089, %v1950
        %v2091 = vadd.f32 %v2090, %v1952
        %v2092 = vadd.f32 %v2091, %v1954
        %v2093 = vadd.f32 %v2092, %v1956
        %v2094 = vadd.f32 %v2093, %v1958
        %v2095 = vadd.f32 %v2094, %v1960
        %v2096 = vadd.f32 %v2095, %v1962
        %v2097 = vadd.f32 %v2096, %v1964
        %v2098 = vadd.f32 %v2097, %v1966
        %v2099 = vrot.slane %v2098, 4
        %v2100 = vadd.f32 %v2098, %v2099
        %v2101 = vrot.slane %v2100, 2
        %v2102 = vadd.f32 %v2100, %v2101
        %v2103 = vrot.slane %v2102, 1
        %v2104 = vadd.f32 %v2102, %v2103
        %s2105 = sld [smem:[#allocation2]]
        %v2106 = vstv %s2105
        %v2107 = vadd.f32 %v2035, %v2106
        %v2108 = vadd.f32 %v2104, %v2106
        %v2109 = vxor.u32 %v2107, 2147483648
        %v2110 = vxor.u32 %v2108, 2147483648
        %v2111 = vmul.f32 %v2109, 1.442695
        %v2112 = vpow.pop %v2111
        %v2113 = vmul.f32 %v2110, 1.442695
        %v2114 = vpow.pop %v2113
        %v2115 = vadd.f32 %v2112, 1.0
        %v2116 = vadd.f32 %v2114, 1.0
        %v2117 = vrcp.pop %v2115
        %v2118 = vmul.f32 1.0, %v2117
        %v2119 = vrcp.pop %v2116
        %v2120 = vmul.f32 1.0, %v2119
        %v2123 = vcombine.low %v2118, %v2120
        %v2125 = vunpack.c.l.s4 1966171168
        %v2126 = vunpack.c.0.s8 %v2125
        %v2127 = vlaneseq
        %v2128 = vshrl.u32 %v2127, 7
        %v2129 = vsub.s32 %v2126, %v2128
        %v2130 = vrot.slane %v2123, %v2129
        %v2132 = vunpack.c.l.s4 1966171168
        %v2133 = vunpack.c.0.s8 %v2132
        %v2134 = vlaneseq
        %v2135 = vshrl.u32 %v2134, 7
        %v2136 = vsub.s32 %v2133, %v2135
        %v2137 = vrot.slane %v2130, %v2136
        %v2139 = vlaneseq
        %vm2140 = vcmp.ge.s32.totalorder %v2139, 0
        %vm2141 = vcmp.lt.s32.totalorder %v2139, 256
        %vm2142 = vmand %vm2140, %vm2141
        %2143 = vst.msk [vmem:[%s243] sm:$0x3] %vm2142, %v2137
        %s2144 = sand.u32 %s154, 1
        %s2145 = scalar_lea.sflag [#allocation4], %s2144
        %s2146 = sand.u32 %s154, 1
        %s2147 = smul.addr %s2146, 2
        %s2148 = scalar_lea.vmem [#allocation3], %s2147
        // Predicated region
        $region41: #{tpu_custom_call.1} parent=39 // pred_check
          %p2149 = pneg %p164
        $region42: #{tpu_custom_call.1} parent=39 // pred_check_branch
          %2151 = sbr.rel (%p2149) target = $region44
        $region43: #{tpu_custom_call.1} parent=39 // pred_region
          %s2152 = smul.u32 2, %s25
          %s2154 = ssub.s32 32, 32
          %2155 = vsyncadd %s2145, %s2154
          %s2156 = smul.addr %s24, 2
          %s2157 = sadd.s32 %s2152, %s2156
          %s2158 = smul.addr %s2157, 16
          %s2159 = scalar_lea.hbm %s5, %s2158
          %s2161 = sshll.u32 %s2148, 4
          %s2162 = int_to_ptr.vmem [resolvable:$true] %s2161
          %2164 = dma.vmem_to_hbm [thread:$0]  %s2162, 32, %s2159, %s2145
        $region44: #{tpu_custom_call.1} parent=39 // pred_fallthru
          _
      $region40: #{tpu_custom_call.1} parent=5 // pred_fallthru
        _
      %p2165 = scmp.le.s32.totalorder 2, %s15
      // Predicated region
      $region45: #{tpu_custom_call.1} parent=5 // pred_check
        %p2166 = pneg %p2165
      $region46: #{tpu_custom_call.1} parent=5 // pred_check_branch
        %2168 = sbr.rel (%p2166) target = $region48
      $region47: #{tpu_custom_call.1} parent=5 // pred_region
        %s2169 = ssub.s32 %s15, 2
        // Predicated region
        $region49: #{tpu_custom_call.1} parent=47 // pred_check
          %p2170 = pneg %p170
        $region50: #{tpu_custom_call.1} parent=47 // pred_check_branch
          %2172 = sbr.rel (%p2170) target = $region52
        $region51: #{tpu_custom_call.1} parent=47 // pred_region
          %s2173 = sand.u32 %s155, 1
          %s2174 = scalar_lea.sflag [#allocation4], %s2173
          %s2175 = sand.u32 %s155, 1
          %s2176 = smul.addr %s2175, 2
          %s2177 = scalar_lea.vmem [#allocation3], %s2176
          %2178 = dma.done %s2174, 32
        $region52: #{tpu_custom_call.1} parent=47 // pred_fallthru
          _
      $region48: #{tpu_custom_call.1} parent=5 // pred_fallthru
        _
    $region6: #{tpu_custom_call.1} parent=1 // loop_footer
      %s19 = sadd.s32 1, %s15
    $region7: #{tpu_custom_call.1} parent=1 // loop_footer_branch
      %14 = sbr.rel target = $region3
    $region8: #{tpu_custom_call.1} parent=1 // loop_exit
      _
    %2179 = vsyncpa [#allocation4], 1
    %s2180 = scalar_lea.sflag [#allocation4], 1
    %2181 = vsyncpa %s2180, 1

</llo_original>
